<compile_context>
chip_gen: v7x
topology: tpu7x:2x2x1
jax: 0.10.0
libtpu: 0.0.40
codegen_flags: <defaults>
</compile_context>

<pallas_src>
import functools

import jax
import jax.numpy as jnp
from jax import lax
from jax.experimental import pallas as pl
from jax.experimental.pallas import tpu as pltpu


# ----------------------------- Pallas kernel -------------------------------

def _mha_fused_kernel(xq_ref, xkv_ref, wq_ref, wkv_ref, wp_ref, bp_ref,
                      o_ref, k_scr, v_scr, *,
                      num_heads, dp, q_tile, mask_value):
    """Fused causal multi-head attention for one (batch, q-tile) grid step.

    xq_ref  : (1, Tq, C)   query-tile input slab
    xkv_ref : (1, T,  C)   full-sequence input slab (for K/V projection)
    wq_ref  : (C, H*Dp)    bf16 Q weights, head-dim padded to Dp, scale folded in
    wkv_ref : (C, 2*H*Dp)  bf16 fused K|V weights, head-dim padded
    wp_ref  : (H*Dp, C)    bf16 output-projection weights, zero rows in padding
    bp_ref  : (1, C)       f32 output-projection bias
    o_ref   : (1, Tq, C)   output slab (lane-dense store)
    k_scr   : (T, H*Dp)    bf16 VMEM scratch, carried across q tiles
    v_scr   : (T, H*Dp)    bf16 VMEM scratch, carried across q tiles
    """
    qi = pl.program_id(1)
    HD = num_heads * dp
    T = k_scr.shape[0]
    C = o_ref.shape[-1]

    # K/V projection once per batch element; carried in VMEM scratch across the
    # (sequential, "arbitrary") q-tile axis.
    @pl.when(qi == 0)
    def _():
        xkv = xkv_ref[0].astype(jnp.bfloat16)                        # (T, C)
        kv = jnp.dot(xkv, wkv_ref[...],
                     preferred_element_type=jnp.float32)             # (T, 2*HD)
        k_scr[...] = kv[:, :HD].astype(jnp.bfloat16)
        v_scr[...] = kv[:, HD:].astype(jnp.bfloat16)

    # Q projection for this tile (scale already folded into the weights).
    xq = xq_ref[0].astype(jnp.bfloat16)                              # (Tq, C)
    q = jnp.dot(xq, wq_ref[...],
                preferred_element_type=jnp.float32)                  # (Tq, HD)
    q = q.astype(jnp.bfloat16)

    # Causal mask with global row offset for this q tile.
    row = qi * q_tile + lax.broadcasted_iota(jnp.int32, (q_tile, T), 0)
    col = lax.broadcasted_iota(jnp.int32, (q_tile, T), 1)
    causal = col <= row

    # Per-head attention + per-head output-projection accumulation (no concat).
    y = jnp.zeros((q_tile, C), jnp.float32)
    dimnum = (((1,), (1,)), ((), ()))    # contract last dims: q_h @ k_h^T, no transpose
    for h in range(num_heads):
        lo = h * dp                                                  # 128-multiple
        qh = q[:, lo:lo + dp]                                        # (Tq, Dp) bf16
        kh = k_scr[:, lo:lo + dp]                                    # (T,  Dp) bf16
        vh = v_scr[:, lo:lo + dp]                                    # (T,  Dp) bf16

        s = lax.dot_general(qh, kh, dimension_numbers=dimnum,
                            preferred_element_type=jnp.float32)      # (Tq, T) f32
        s = jnp.where(causal, s, mask_value)
        s = s - jnp.max(s, axis=-1, keepdims=True)
        p = jnp.exp(s)
        p = p * pl.reciprocal(jnp.sum(p, axis=-1, keepdims=True), approx=False)

        oh = jnp.dot(p.astype(jnp.bfloat16), vh,
                     preferred_element_type=jnp.float32)             # (Tq, Dp)
        y += jnp.dot(oh.astype(jnp.bfloat16), wp_ref[lo:lo + dp, :],
                     preferred_element_type=jnp.float32)             # (Tq, C)

    o_ref[0] = (y + bp_ref[...]).astype(o_ref.dtype)


# ------------------------------ Python wrapper ------------------------------

def multi_head_attention(x, wq, wk, wv, wp, bp, *, q_tile=None):
    """x: (B, T, C); wq/wk/wv: (H, C, Dh); wp: (H*Dh, C); bp: (C,)."""
    B, T, C = x.shape
    H, _, Dh = wq.shape
    dp = max(128, ((Dh + 127) // 128) * 128)    # lane-aligned padded head dim
    HD = H * dp
    scale = Dh ** -0.5

    if q_tile is None:
        q_tile = min(T, 128)
    assert T % q_tile == 0, "q_tile must divide T"
    n_qt = T // q_tile

    def _pad_heads(w):                          # (H, C, Dh) -> (C, H*dp), zero-padded
        w = jnp.transpose(w, (1, 0, 2))                       # (C, H, Dh)
        w = jnp.pad(w, ((0, 0), (0, 0), (0, dp - Dh)))        # (C, H, dp)
        return w.reshape(C, HD)

    # One-time wrapper-side weight prep: fold 1/sqrt(Dh) into Q, pad heads to
    # 128 lanes, fuse K|V, cast MXU weight operands to bf16.
    wq_f = _pad_heads(wq * scale).astype(jnp.bfloat16)                       # (C, HD)
    wkv_f = jnp.concatenate([_pad_heads(wk), _pad_heads(wv)],
                            axis=-1).astype(jnp.bfloat16)                    # (C, 2*HD)
    wp_f = jnp.pad(wp.reshape(H, Dh, C),
                   ((0, 0), (0, dp - Dh), (0, 0))).reshape(HD, C)
    wp_f = wp_f.astype(jnp.bfloat16)                                         # (HD, C)
    bp_f = bp.reshape(1, C).astype(jnp.float32)

    kernel = functools.partial(_mha_fused_kernel, num_heads=H, dp=dp,
                               q_tile=q_tile, mask_value=-1e30)

    return pl.pallas_call(
        kernel,
        out_shape=jax.ShapeDtypeStruct((B, T, C), x.dtype),
        grid_spec=pltpu.PrefetchScalarGridSpec(
            num_scalar_prefetch=0,
            grid=(B, n_qt),
            in_specs=[
                pl.BlockSpec((1, q_tile, C), lambda b, qi: (b, qi, 0)),   # Q tile
                pl.BlockSpec((1, T, C), lambda b, qi: (b, 0, 0)),         # full seq for K/V
                pl.BlockSpec((C, HD), lambda b, qi: (0, 0)),
                pl.BlockSpec((C, 2 * HD), lambda b, qi: (0, 0)),
                pl.BlockSpec((HD, C), lambda b, qi: (0, 0)),
                pl.BlockSpec((1, C), lambda b, qi: (0, 0)),
            ],
            out_specs=pl.BlockSpec((1, q_tile, C), lambda b, qi: (b, qi, 0)),
            scratch_shapes=[
                pltpu.VMEM((T, HD), jnp.bfloat16),   # K, carried across q tiles
                pltpu.VMEM((T, HD), jnp.bfloat16),   # V, carried across q tiles
            ],
        ),
        compiler_params=pltpu.CompilerParams(
            dimension_semantics=("parallel", "arbitrary"),
            vmem_limit_bytes=32 * 1024 * 1024,
        ),
    )(x, x, wq_f, wkv_f, wp_f, bp_f)


# ----------------------------- pure-JAX reference ---------------------------

def multi_head_attention_ref(x, wq, wk, wv, wp, bp):
    B, T, C = x.shape
    H, _, Dh = wq.shape
    q = jnp.einsum("btc,hcd->bhtd", x, wq)
    k = jnp.einsum("btc,hcd->bhtd", x, wk)
    v = jnp.einsum("btc,hcd->bhtd", x, wv)
    s = jnp.einsum("bhtd,bhsd->bhts", q, k) * (Dh ** -0.5)
    mask = jnp.tril(jnp.ones((T, T), bool))
    s = jnp.where(mask, s, -jnp.inf)
    p = jax.nn.softmax(s, axis=-1)
    o = jnp.einsum("bhts,bhsd->bhtd", p, v)
    cat = jnp.transpose(o, (0, 2, 1, 3)).reshape(B, T, H * Dh)
    return cat @ wp + bp


# ---------------------------------- main ------------------------------------

if __name__ == "__main__":
    # Small shapes consistent with the module's forward (B, T, n_embd);
    # num_heads * head_size == n_embd as in the GPT config.
    B, T = 2, 16
    n_embd = 64
    num_heads = 4
    head_size = n_embd // num_heads

    key = jax.random.PRNGKey(0)
    kx, kq, kk, kv, kp, kb = jax.random.split(key, 6)

    x = jax.random.normal(kx, (B, T, n_embd), dtype=jnp.float32)

    # Deterministic parameter init (PyTorch Linear-style uniform bound).
    bound_in = 1.0 / (n_embd ** 0.5)
    wq = jax.random.uniform(kq, (num_heads, n_embd, head_size),
                            minval=-bound_in, maxval=bound_in,
                            dtype=jnp.float32)
    wk = jax.random.uniform(kk, (num_heads, n_embd, head_size),
                            minval=-bound_in, maxval=bound_in,
                            dtype=jnp.float32)
    wv = jax.random.uniform(kv, (num_heads, n_embd, head_size),
                            minval=-bound_in, maxval=bound_in,
                            dtype=jnp.float32)
    bound_p = 1.0 / ((num_heads * head_size) ** 0.5)
    wp = jax.random.uniform(kp, (num_heads * head_size, n_embd),
                            minval=-bound_p, maxval=bound_p,
                            dtype=jnp.float32)
    bp = jax.random.uniform(kb, (n_embd,), minval=-bound_p, maxval=bound_p,
                            dtype=jnp.float32)

    # q_tile=8 -> two q tiles per batch element, exercising the K/V-scratch
    # carry across the "arbitrary" grid axis and the cross-tile causal mask.
    out = multi_head_attention(x, wq, wk, wv, wp, bp, q_tile=8)
    out = jax.block_until_ready(out)

    ref = multi_head_attention_ref(x, wq, wk, wv, wp, bp)
    assert out.shape == (B, T, n_embd)
    # Tolerance accounts for bf16 MXU operands (accumulation + softmax are f32).
    assert jnp.allclose(out, ref, atol=3e-2, rtol=3e-2), "mismatch vs reference"

    print("KERNEL_OK")
</pallas_src>

<mosaic_0001>
module attributes {stable_mosaic.version = 11 : i64} {
  func.func @_mha_fused_kernel(%arg0: i32, %arg1: i32, %arg2: memref<1x8x64xf32, #tpu.memory_space<vmem>>, %arg3: memref<1x16x64xf32, #tpu.memory_space<vmem>>, %arg4: memref<64x512xbf16, #tpu.memory_space<vmem>>, %arg5: memref<64x1024xbf16, #tpu.memory_space<vmem>>, %arg6: memref<512x64xbf16, #tpu.memory_space<vmem>>, %arg7: memref<1x64xf32, #tpu.memory_space<vmem>>, %arg8: memref<1x8x64xf32, #tpu.memory_space<vmem>>, %arg9: memref<16x512xbf16, #tpu.memory_space<vmem>>, %arg10: memref<16x512xbf16, #tpu.memory_space<vmem>>) attributes {dimension_semantics = [#tpu.dimension_semantics<parallel>, #tpu.dimension_semantics<arbitrary>], iteration_bounds = array<i64: 2, 2>, scalar_prefetch = 0 : i64, scratch_operands = 2 : i64, tpu.core_type = #tpu.core_type<tc>, window_params = [{transform_indices = @transform_0, window_bounds = array<i64: 1, 8, 64>}, {transform_indices = @transform_1, window_bounds = array<i64: 1, 16, 64>}, {pipeline_mode = #tpu.pipeline_mode<synchronous>, transform_indices = @transform_2, window_bounds = array<i64: 64, 512>}, {pipeline_mode = #tpu.pipeline_mode<synchronous>, transform_indices = @transform_3, window_bounds = array<i64: 64, 1024>}, {pipeline_mode = #tpu.pipeline_mode<synchronous>, transform_indices = @transform_4, window_bounds = array<i64: 512, 64>}, {pipeline_mode = #tpu.pipeline_mode<synchronous>, transform_indices = @transform_5, window_bounds = array<i64: 1, 64>}, {transform_indices = @transform_6, window_bounds = array<i64: 1, 8, 64>}]} {
    %c0_i32 = arith.constant 0 : i32
    %0 = arith.cmpi eq, %arg1, %c0_i32 : i32
    %1 = arith.extui %0 : i1 to i32
    %c0_i32_0 = arith.constant 0 : i32
    %2 = arith.cmpi ne, %1, %c0_i32_0 : i32
    scf.if %2 {
      %c0_56 = arith.constant 0 : index
      %c0_57 = arith.constant 0 : index
      %c0_58 = arith.constant 0 : index
      %110 = vector.load %arg3[%c0_56, %c0_57, %c0_58] : memref<1x16x64xf32, #tpu.memory_space<vmem>>, vector<1x16x64xf32>
      %111 = vector.shape_cast %110 : vector<1x16x64xf32> to vector<16x64xf32>
      %112 = arith.truncf %111 : vector<16x64xf32> to vector<16x64xbf16>
      %c0_59 = arith.constant 0 : index
      %c0_60 = arith.constant 0 : index
      %113 = vector.load %arg5[%c0_59, %c0_60] : memref<64x1024xbf16, #tpu.memory_space<vmem>>, vector<64x1024xbf16>
      %cst_61 = arith.constant dense<0.000000e+00> : vector<16x1024xf32>
      %114 = tpu.matmul %112, %113, %cst_61 {dimension_numbers = #tpu.dot_dimension_numbers<[1], [0], [0], [1], [0, 0, 1, 1], [], []>} : vector<16x64xbf16>, vector<64x1024xbf16>, vector<16x1024xf32> -> vector<16x1024xf32>
      %115 = vector.extract_strided_slice %114 {offsets = [0, 0], sizes = [16, 512], strides = [1, 1]} : vector<16x1024xf32> to vector<16x512xf32>
      %116 = arith.truncf %115 : vector<16x512xf32> to vector<16x512xbf16>
      %c0_62 = arith.constant 0 : index
      %c0_63 = arith.constant 0 : index
      %117 = vector.load %arg9[%c0_62, %c0_63] : memref<16x512xbf16, #tpu.memory_space<vmem>>, vector<16x512xbf16>
      tpu.vector_store %arg9[%c0_62, %c0_63], %116 {strides = array<i32>} : memref<16x512xbf16, #tpu.memory_space<vmem>>, vector<16x512xbf16>,
      %118 = vector.extract_strided_slice %114 {offsets = [0, 512], sizes = [16, 512], strides = [1, 1]} : vector<16x1024xf32> to vector<16x512xf32>
      %119 = arith.truncf %118 : vector<16x512xf32> to vector<16x512xbf16>
      %c0_64 = arith.constant 0 : index
      %c0_65 = arith.constant 0 : index
      %120 = vector.load %arg10[%c0_64, %c0_65] : memref<16x512xbf16, #tpu.memory_space<vmem>>, vector<16x512xbf16>
      tpu.vector_store %arg10[%c0_64, %c0_65], %119 {strides = array<i32>} : memref<16x512xbf16, #tpu.memory_space<vmem>>, vector<16x512xbf16>,
    } else {
    }
    %c0 = arith.constant 0 : index
    %c0_1 = arith.constant 0 : index
    %c0_2 = arith.constant 0 : index
    %3 = vector.load %arg2[%c0, %c0_1, %c0_2] : memref<1x8x64xf32, #tpu.memory_space<vmem>>, vector<1x8x64xf32>
    %4 = vector.shape_cast %3 : vector<1x8x64xf32> to vector<8x64xf32>
    %5 = arith.truncf %4 : vector<8x64xf32> to vector<8x64xbf16>
    %c0_3 = arith.constant 0 : index
    %c0_4 = arith.constant 0 : index
    %6 = vector.load %arg4[%c0_3, %c0_4] : memref<64x512xbf16, #tpu.memory_space<vmem>>, vector<64x512xbf16>
    %cst = arith.constant dense<0.000000e+00> : vector<8x512xf32>
    %7 = tpu.matmul %5, %6, %cst {dimension_numbers = #tpu.dot_dimension_numbers<[1], [0], [0], [1], [0, 0, 1, 1], [], []>} : vector<8x64xbf16>, vector<64x512xbf16>, vector<8x512xf32> -> vector<8x512xf32>
    %8 = arith.truncf %7 : vector<8x512xf32> to vector<8x512xbf16>
    %c8_i32 = arith.constant 8 : i32
    %9 = arith.muli %arg1, %c8_i32 : i32
    %10 = tpu.iota {dimensions = array<i32: 0>} : vector<8x16xi32>
    %11 = vector.broadcast %9 : i32 to vector<8x16xi32>
    %12 = arith.addi %11, %10 : vector<8x16xi32>
    %13 = tpu.iota {dimensions = array<i32: 1>} : vector<8x16xi32>
    %14 = arith.cmpi sle, %13, %12 : vector<8x16xi32>
    %cst_5 = arith.constant 0.000000e+00 : f32
    %15 = vector.broadcast %cst_5 : f32 to vector<8x64xf32>
    %16 = vector.extract_strided_slice %8 {offsets = [0, 0], sizes = [8, 128], strides = [1, 1]} : vector<8x512xbf16> to vector<8x128xbf16>
    %c0_6 = arith.constant 0 : index
    %c0_7 = arith.constant 0 : index
    %17 = vector.load %arg9[%c0_6, %c0_7] : memref<16x512xbf16, #tpu.memory_space<vmem>>, vector<16x128xbf16>
    %c0_8 = arith.constant 0 : index
    %c0_9 = arith.constant 0 : index
    %18 = vector.load %arg10[%c0_8, %c0_9] : memref<16x512xbf16, #tpu.memory_space<vmem>>, vector<16x128xbf16>
    %cst_10 = arith.constant dense<0.000000e+00> : vector<8x16xf32>
    %19 = tpu.matmul %16, %17, %cst_10 {dimension_numbers = #tpu.dot_dimension_numbers<[1], [1], [0], [0], [0, 0, 1, 0], [], []>} : vector<8x128xbf16>, vector<16x128xbf16>, vector<8x16xf32> -> vector<8x16xf32>
    %cst_11 = arith.constant -1.000000e+30 : f32
    %20 = vector.broadcast %cst_11 : f32 to vector<8x16xf32>
    %21 = arith.select %14, %19, %20 : vector<8x16xi1>, vector<8x16xf32>
    %cst_12 = arith.constant dense<0xFF800000> : vector<8xf32>
    %22 = vector.multi_reduction <maximumf>, %21, %cst_12 [1] : vector<8x16xf32> to vector<8xf32>
    %23 = vector.shape_cast %22 : vector<8xf32> to vector<8x1xf32>
    %24 = vector.broadcast %23 : vector<8x1xf32> to vector<8x16xf32>
    %25 = arith.subf %21, %24 : vector<8x16xf32>
    %26 = math.exp %25 : vector<8x16xf32>
    %cst_13 = arith.constant dense<0.000000e+00> : vector<8xf32>
    %27 = vector.multi_reduction <add>, %26, %cst_13 [1] : vector<8x16xf32> to vector<8xf32>
    %28 = vector.shape_cast %27 : vector<8xf32> to vector<8x1xf32>
    %29 = tpu.reciprocal %28 : vector<8x1xf32> -> vector<8x1xf32>
    %30 = vector.broadcast %29 : vector<8x1xf32> to vector<8x16xf32>
    %31 = arith.mulf %26, %30 : vector<8x16xf32>
    %32 = arith.truncf %31 : vector<8x16xf32> to vector<8x16xbf16>
    %cst_14 = arith.constant dense<0.000000e+00> : vector<8x128xf32>
    %33 = tpu.matmul %32, %18, %cst_14 {dimension_numbers = #tpu.dot_dimension_numbers<[1], [0], [0], [1], [0, 0, 1, 1], [], []>} : vector<8x16xbf16>, vector<16x128xbf16>, vector<8x128xf32> -> vector<8x128xf32>
    %34 = arith.truncf %33 : vector<8x128xf32> to vector<8x128xbf16>
    %c0_15 = arith.constant 0 : index
    %c0_16 = arith.constant 0 : index
    %35 = vector.load %arg6[%c0_15, %c0_16] : memref<512x64xbf16, #tpu.memory_space<vmem>>, vector<128x64xbf16>
    %cst_17 = arith.constant dense<0.000000e+00> : vector<8x64xf32>
    %36 = tpu.matmul %34, %35, %cst_17 {dimension_numbers = #tpu.dot_dimension_numbers<[1], [0], [0], [1], [0, 0, 1, 1], [], []>} : vector<8x128xbf16>, vector<128x64xbf16>, vector<8x64xf32> -> vector<8x64xf32>
    %37 = arith.addf %15, %36 : vector<8x64xf32>
    %38 = vector.extract_strided_slice %8 {offsets = [0, 128], sizes = [8, 128], strides = [1, 1]} : vector<8x512xbf16> to vector<8x128xbf16>
    %c0_18 = arith.constant 0 : index
    %c128 = arith.constant 128 : index
    %39 = vector.load %arg9[%c0_18, %c128] : memref<16x512xbf16, #tpu.memory_space<vmem>>, vector<16x128xbf16>
    %c0_19 = arith.constant 0 : index
    %c128_20 = arith.constant 128 : index
    %40 = vector.load %arg10[%c0_19, %c128_20] : memref<16x512xbf16, #tpu.memory_space<vmem>>, vector<16x128xbf16>
    %cst_21 = arith.constant dense<0.000000e+00> : vector<8x16xf32>
    %41 = tpu.matmul %38, %39, %cst_21 {dimension_numbers = #tpu.dot_dimension_numbers<[1], [1], [0], [0], [0, 0, 1, 0], [], []>} : vector<8x128xbf16>, vector<16x128xbf16>, vector<8x16xf32> -> vector<8x16xf32>
    %cst_22 = arith.constant -1.000000e+30 : f32
    %42 = vector.broadcast %cst_22 : f32 to vector<8x16xf32>
    %43 = arith.select %14, %41, %42 : vector<8x16xi1>, vector<8x16xf32>
    %cst_23 = arith.constant dense<0xFF800000> : vector<8xf32>
    %44 = vector.multi_reduction <maximumf>, %43, %cst_23 [1] : vector<8x16xf32> to vector<8xf32>
    %45 = vector.shape_cast %44 : vector<8xf32> to vector<8x1xf32>
    %46 = vector.broadcast %45 : vector<8x1xf32> to vector<8x16xf32>
    %47 = arith.subf %43, %46 : vector<8x16xf32>
    %48 = math.exp %47 : vector<8x16xf32>
    %cst_24 = arith.constant dense<0.000000e+00> : vector<8xf32>
    %49 = vector.multi_reduction <add>, %48, %cst_24 [1] : vector<8x16xf32> to vector<8xf32>
    %50 = vector.shape_cast %49 : vector<8xf32> to vector<8x1xf32>
    %51 = tpu.reciprocal %50 : vector<8x1xf32> -> vector<8x1xf32>
    %52 = vector.broadcast %51 : vector<8x1xf32> to vector<8x16xf32>
    %53 = arith.mulf %48, %52 : vector<8x16xf32>
    %54 = arith.truncf %53 : vector<8x16xf32> to vector<8x16xbf16>
    %cst_25 = arith.constant dense<0.000000e+00> : vector<8x128xf32>
    %55 = tpu.matmul %54, %40, %cst_25 {dimension_numbers = #tpu.dot_dimension_numbers<[1], [0], [0], [1], [0, 0, 1, 1], [], []>} : vector<8x16xbf16>, vector<16x128xbf16>, vector<8x128xf32> -> vector<8x128xf32>
    %56 = arith.truncf %55 : vector<8x128xf32> to vector<8x128xbf16>
    %c128_26 = arith.constant 128 : index
    %c0_27 = arith.constant 0 : index
    %57 = vector.load %arg6[%c128_26, %c0_27] : memref<512x64xbf16, #tpu.memory_space<vmem>>, vector<128x64xbf16>
    %cst_28 = arith.constant dense<0.000000e+00> : vector<8x64xf32>
    %58 = tpu.matmul %56, %57, %cst_28 {dimension_numbers = #tpu.dot_dimension_numbers<[1], [0], [0], [1], [0, 0, 1, 1], [], []>} : vector<8x128xbf16>, vector<128x64xbf16>, vector<8x64xf32> -> vector<8x64xf32>
    %59 = arith.addf %37, %58 : vector<8x64xf32>
    %60 = vector.extract_strided_slice %8 {offsets = [0, 256], sizes = [8, 128], strides = [1, 1]} : vector<8x512xbf16> to vector<8x128xbf16>
    %c0_29 = arith.constant 0 : index
    %c256 = arith.constant 256 : index
    %61 = vector.load %arg9[%c0_29, %c256] : memref<16x512xbf16, #tpu.memory_space<vmem>>, vector<16x128xbf16>
    %c0_30 = arith.constant 0 : index
    %c256_31 = arith.constant 256 : index
    %62 = vector.load %arg10[%c0_30, %c256_31] : memref<16x512xbf16, #tpu.memory_space<vmem>>, vector<16x128xbf16>
    %cst_32 = arith.constant dense<0.000000e+00> : vector<8x16xf32>
    %63 = tpu.matmul %60, %61, %cst_32 {dimension_numbers = #tpu.dot_dimension_numbers<[1], [1], [0], [0], [0, 0, 1, 0], [], []>} : vector<8x128xbf16>, vector<16x128xbf16>, vector<8x16xf32> -> vector<8x16xf32>
    %cst_33 = arith.constant -1.000000e+30 : f32
    %64 = vector.broadcast %cst_33 : f32 to vector<8x16xf32>
    %65 = arith.select %14, %63, %64 : vector<8x16xi1>, vector<8x16xf32>
    %cst_34 = arith.constant dense<0xFF800000> : vector<8xf32>
    %66 = vector.multi_reduction <maximumf>, %65, %cst_34 [1] : vector<8x16xf32> to vector<8xf32>
    %67 = vector.shape_cast %66 : vector<8xf32> to vector<8x1xf32>
    %68 = vector.broadcast %67 : vector<8x1xf32> to vector<8x16xf32>
    %69 = arith.subf %65, %68 : vector<8x16xf32>
    %70 = math.exp %69 : vector<8x16xf32>
    %cst_35 = arith.constant dense<0.000000e+00> : vector<8xf32>
    %71 = vector.multi_reduction <add>, %70, %cst_35 [1] : vector<8x16xf32> to vector<8xf32>
    %72 = vector.shape_cast %71 : vector<8xf32> to vector<8x1xf32>
    %73 = tpu.reciprocal %72 : vector<8x1xf32> -> vector<8x1xf32>
    %74 = vector.broadcast %73 : vector<8x1xf32> to vector<8x16xf32>
    %75 = arith.mulf %70, %74 : vector<8x16xf32>
    %76 = arith.truncf %75 : vector<8x16xf32> to vector<8x16xbf16>
    %cst_36 = arith.constant dense<0.000000e+00> : vector<8x128xf32>
    %77 = tpu.matmul %76, %62, %cst_36 {dimension_numbers = #tpu.dot_dimension_numbers<[1], [0], [0], [1], [0, 0, 1, 1], [], []>} : vector<8x16xbf16>, vector<16x128xbf16>, vector<8x128xf32> -> vector<8x128xf32>
    %78 = arith.truncf %77 : vector<8x128xf32> to vector<8x128xbf16>
    %c256_37 = arith.constant 256 : index
    %c0_38 = arith.constant 0 : index
    %79 = vector.load %arg6[%c256_37, %c0_38] : memref<512x64xbf16, #tpu.memory_space<vmem>>, vector<128x64xbf16>
    %cst_39 = arith.constant dense<0.000000e+00> : vector<8x64xf32>
    %80 = tpu.matmul %78, %79, %cst_39 {dimension_numbers = #tpu.dot_dimension_numbers<[1], [0], [0], [1], [0, 0, 1, 1], [], []>} : vector<8x128xbf16>, vector<128x64xbf16>, vector<8x64xf32> -> vector<8x64xf32>
    %81 = arith.addf %59, %80 : vector<8x64xf32>
    %82 = vector.extract_strided_slice %8 {offsets = [0, 384], sizes = [8, 128], strides = [1, 1]} : vector<8x512xbf16> to vector<8x128xbf16>
    %c0_40 = arith.constant 0 : index
    %c384 = arith.constant 384 : index
    %83 = vector.load %arg9[%c0_40, %c384] : memref<16x512xbf16, #tpu.memory_space<vmem>>, vector<16x128xbf16>
    %c0_41 = arith.constant 0 : index
    %c384_42 = arith.constant 384 : index
    %84 = vector.load %arg10[%c0_41, %c384_42] : memref<16x512xbf16, #tpu.memory_space<vmem>>, vector<16x128xbf16>
    %cst_43 = arith.constant dense<0.000000e+00> : vector<8x16xf32>
    %85 = tpu.matmul %82, %83, %cst_43 {dimension_numbers = #tpu.dot_dimension_numbers<[1], [1], [0], [0], [0, 0, 1, 0], [], []>} : vector<8x128xbf16>, vector<16x128xbf16>, vector<8x16xf32> -> vector<8x16xf32>
    %cst_44 = arith.constant -1.000000e+30 : f32
    %86 = vector.broadcast %cst_44 : f32 to vector<8x16xf32>
    %87 = arith.select %14, %85, %86 : vector<8x16xi1>, vector<8x16xf32>
    %cst_45 = arith.constant dense<0xFF800000> : vector<8xf32>
    %88 = vector.multi_reduction <maximumf>, %87, %cst_45 [1] : vector<8x16xf32> to vector<8xf32>
    %89 = vector.shape_cast %88 : vector<8xf32> to vector<8x1xf32>
    %90 = vector.broadcast %89 : vector<8x1xf32> to vector<8x16xf32>
    %91 = arith.subf %87, %90 : vector<8x16xf32>
    %92 = math.exp %91 : vector<8x16xf32>
    %cst_46 = arith.constant dense<0.000000e+00> : vector<8xf32>
    %93 = vector.multi_reduction <add>, %92, %cst_46 [1] : vector<8x16xf32> to vector<8xf32>
    %94 = vector.shape_cast %93 : vector<8xf32> to vector<8x1xf32>
    %95 = tpu.reciprocal %94 : vector<8x1xf32> -> vector<8x1xf32>
    %96 = vector.broadcast %95 : vector<8x1xf32> to vector<8x16xf32>
    %97 = arith.mulf %92, %96 : vector<8x16xf32>
    %98 = arith.truncf %97 : vector<8x16xf32> to vector<8x16xbf16>
    %cst_47 = arith.constant dense<0.000000e+00> : vector<8x128xf32>
    %99 = tpu.matmul %98, %84, %cst_47 {dimension_numbers = #tpu.dot_dimension_numbers<[1], [0], [0], [1], [0, 0, 1, 1], [], []>} : vector<8x16xbf16>, vector<16x128xbf16>, vector<8x128xf32> -> vector<8x128xf32>
    %100 = arith.truncf %99 : vector<8x128xf32> to vector<8x128xbf16>
    %c384_48 = arith.constant 384 : index
    %c0_49 = arith.constant 0 : index
    %101 = vector.load %arg6[%c384_48, %c0_49] : memref<512x64xbf16, #tpu.memory_space<vmem>>, vector<128x64xbf16>
    %cst_50 = arith.constant dense<0.000000e+00> : vector<8x64xf32>
    %102 = tpu.matmul %100, %101, %cst_50 {dimension_numbers = #tpu.dot_dimension_numbers<[1], [0], [0], [1], [0, 0, 1, 1], [], []>} : vector<8x128xbf16>, vector<128x64xbf16>, vector<8x64xf32> -> vector<8x64xf32>
    %103 = arith.addf %81, %102 : vector<8x64xf32>
    %c0_51 = arith.constant 0 : index
    %c0_52 = arith.constant 0 : index
    %104 = vector.load %arg7[%c0_51, %c0_52] : memref<1x64xf32, #tpu.memory_space<vmem>>, vector<1x64xf32>
    %105 = vector.broadcast %104 : vector<1x64xf32> to vector<8x64xf32>
    %106 = arith.addf %103, %105 : vector<8x64xf32>
    %c0_53 = arith.constant 0 : index
    %c0_54 = arith.constant 0 : index
    %c0_55 = arith.constant 0 : index
    %107 = vector.load %arg8[%c0_53, %c0_54, %c0_55] : memref<1x8x64xf32, #tpu.memory_space<vmem>>, vector<1x8x64xf32>
    %108 = vector.shape_cast %107 : vector<1x8x64xf32> to vector<8x64xf32>
    %109 = vector.shape_cast %106 : vector<8x64xf32> to vector<1x8x64xf32>
    tpu.vector_store %arg8[%c0_53, %c0_54, %c0_55], %109 {strides = array<i32>} : memref<1x8x64xf32, #tpu.memory_space<vmem>>, vector<1x8x64xf32>,
    return
  }
  func.func @transform_0(%arg0: i32, %arg1: i32) -> (i32, i32, i32) {
    %c0_i32 = arith.constant 0 : i32
    %c0_i32_0 = arith.constant 0 : i32
    return %arg0, %arg1, %c0_i32 : i32, i32, i32
  }
  func.func @transform_1(%arg0: i32, %arg1: i32) -> (i32, i32, i32) {
    %c0_i32 = arith.constant 0 : i32
    %c0_i32_0 = arith.constant 0 : i32
    %c0_i32_1 = arith.constant 0 : i32
    return %arg0, %c0_i32, %c0_i32_0 : i32, i32, i32
  }
  func.func @transform_2(%arg0: i32, %arg1: i32) -> (i32, i32) {
    %c0_i32 = arith.constant 0 : i32
    %c0_i32_0 = arith.constant 0 : i32
    %c0_i32_1 = arith.constant 0 : i32
    return %c0_i32, %c0_i32_0 : i32, i32
  }
  func.func @transform_3(%arg0: i32, %arg1: i32) -> (i32, i32) {
    %c0_i32 = arith.constant 0 : i32
    %c0_i32_0 = arith.constant 0 : i32
    %c0_i32_1 = arith.constant 0 : i32
    return %c0_i32, %c0_i32_0 : i32, i32
  }
  func.func @transform_4(%arg0: i32, %arg1: i32) -> (i32, i32) {
    %c0_i32 = arith.constant 0 : i32
    %c0_i32_0 = arith.constant 0 : i32
    %c0_i32_1 = arith.constant 0 : i32
    return %c0_i32, %c0_i32_0 : i32, i32
  }
  func.func @transform_5(%arg0: i32, %arg1: i32) -> (i32, i32) {
    %c0_i32 = arith.constant 0 : i32
    %c0_i32_0 = arith.constant 0 : i32
    %c0_i32_1 = arith.constant 0 : i32
    return %c0_i32, %c0_i32_0 : i32, i32
  }
  func.func @transform_6(%arg0: i32, %arg1: i32) -> (i32, i32, i32) {
    %c0_i32 = arith.constant 0 : i32
    %c0_i32_0 = arith.constant 0 : i32
    return %arg0, %arg1, %c0_i32 : i32, i32, i32
  }
}

</mosaic_0001>

<llo_original>
// kernel: tpu_custom_call.1
$region0: #{tpu_custom_call.1}
  #allocation0 [shape = 'u32[]', space=smem, size = 0x4, offset = 0x4, fixed_abs, tag = 'smem constant byte address 0x4 - core index']
  #allocation1 [shape = 'u32[144,128]{1,0:T(1,128)}', space=vmem, size = 0x12000, scoped, tag = 'internal scratch']
  #allocation2 [shape = 'bf16[16,512]{1,0:T(16,128)(2,1)}', space=vmem, size = 0x4000, scoped, tag = 'scratch operand']
  #allocation3 [shape = 'bf16[16,512]{1,0:T(16,128)(2,1)}', space=vmem, size = 0x4000, scoped, tag = 'scratch operand']
  %s0 = inlined_call_operand.hbm [shape: f32[2,16,64], index: 0, kind: input, shape index: {}]
  %s1 = inlined_call_operand.hbm [shape: f32[2,16,64], index: 1, kind: input, shape index: {}]
  %s2 = inlined_call_operand.vmem [shape: bf16[64,512], index: 2, kind: input, shape index: {}]
  %s3 = inlined_call_operand.vmem [shape: bf16[64,1024], index: 3, kind: input, shape index: {}]
  %s4 = inlined_call_operand.vmem [shape: bf16[512,64], index: 4, kind: input, shape index: {}]
  %s5 = inlined_call_operand.vmem [shape: f32[1,64], index: 5, kind: input, shape index: {}]
  %s6 = inlined_call_operand.hbm [shape: f32[2,16,64], index: 6, kind: output, shape index: {}]
  %s7 = sld [smem:[#allocation0]]
  $region69: #{tpu_custom_call.1} parent=0
    _
  %s9 = ssub.s32 1, %s7
  %s10 = scalar_select 0, %s9, %s7
  $region1: #{tpu_custom_call.1} parent=0
    #allocation4 [shape = 'u8[8192]{0}', space=vmem, size = 0x2000, scoped, tag = 'input window, operand 0']
    #allocation5 [shape = 's32[2]{0}', space=sflag, size = 0x8, scoped, tag = 'scoped memory for tpu_custom_call.1']
    #allocation6 [shape = 's32[2]{0}', space=sflag, size = 0x8, scoped, tag = 'scoped memory for tpu_custom_call.1']
    #allocation7 [shape = 'u8[16384]{0}', space=vmem, size = 0x4000, scoped, tag = 'input window, operand 1']
    #allocation8 [shape = 's32[2]{0}', space=sflag, size = 0x8, scoped, tag = 'scoped memory for tpu_custom_call.1']
    #allocation9 [shape = 'u8[8192]{0}', space=vmem, size = 0x2000, scoped, tag = 'output window, operand 0']
    %11 = vsyncpa [#allocation5], 0
    %s12 = scalar_lea.sflag [#allocation5], 1
    %13 = vsyncpa %s12, 0
    %14 = vsyncpa [#allocation8], 0
    %s15 = scalar_lea.sflag [#allocation8], 1
    %16 = vsyncpa %s15, 0
    %17 = vsyncpa [#allocation6], 0
    %s18 = scalar_lea.sflag [#allocation6], 1
    %19 = vsyncpa %s18, 0
    loop: start=0, step=1, limit=6
    $region2: #{tpu_custom_call.1} parent=1 // loop_pre_header
      _
    $region3: #{tpu_custom_call.1} parent=1 // loop_header
      %s21 = sphi 0, %s25
      %p22 = scmp.ge.s32.totalorder %s21, 6
      %s28 = sphi 0, %s40
      %s29 = sphi 0, %s36
      %s30 = sphi 0, %s28
      %s31 = sphi 0, %s29
      %s32 = sphi 0, %s30
      %s33 = sphi 0, %s31
      %s45 = sphi 0, %s47
      %s48 = sphi 0, %s45
      %s49 = sphi 0, %s48
      %s65 = sphi 0, %s49
      %s71 = sphi 0, %s73
      %s74 = sphi 0, %s71
      %s75 = sphi 0, %s74
      %s91 = sphi 0, %s75
      %s95 = sphi 0, %s95
      %s97 = sphi 0, %s95
      %s98 = sphi 0, %s97
      %s112 = sphi 0, %s98
      %s116 = sphi 0, %s116
      %s118 = sphi 0, %s116
      %s119 = sphi 0, %s118
      %s133 = sphi 0, %s119
      %s137 = sphi 0, %s137
      %s139 = sphi 0, %s137
      %s140 = sphi 0, %s139
      %s154 = sphi 0, %s140
      %s158 = sphi 0, %s158
      %s160 = sphi 0, %s158
      %s161 = sphi 0, %s160
      %s175 = sphi 0, %s161
      %s183 = sphi 0, %s185
      %s186 = sphi 0, %s183
      %s187 = sphi 0, %s186
      %s203 = sphi 0, %s187
    $region4: #{tpu_custom_call.1} parent=1 // loop_header_branch
      %24 = sbr.rel (%p22) target = $region8
    $region5: #{tpu_custom_call.1} parent=1 // loop_body
      %s26 = ssub.s32 %s21, 1
      %s27 = ssub.s32 %s21, 2
      %s34 = sadd.s32 1, %s29
      %p35 = scmp.ge.s32.totalorder %s34, 2
      %s36 = scalar_select %p35, 0, %s34
      %s37 = sadd.s32 1, %s28
      %s38 = scalar_select %p35, %s37, %s28
      %p39 = scmp.ge.s32.totalorder %s38, 2
      %s40 = scalar_select %p39, 0, %s38
      %s41 = ssub.s32 %s28, %s40
      %s42 = ssub.s32 %s29, %s36
      %s43 = sor.u32 %s41, %s42
      %p44 = scmp.eq.s32.totalorder %s43, 0
      %s46 = sadd.s32 %s45, 1
      %s47 = scalar_select %p44, %s45, %s46
      %p50 = pneg %p44
      %p51 = scmp.eq.s32.totalorder %s21, 3
      %p52 = por %p50, %p51
      %p53 = scmp.ne.s32.totalorder %s45, %s48
      %p54 = scmp.eq.s32.totalorder %s21, 0
      %p55 = por %p53, %p54
      %p56 = scmp.ne.s32.totalorder %s45, %s48
      %p57 = scmp.eq.s32.totalorder %s26, 3
      %p58 = por %p56, %p57
      %p59 = scmp.ne.s32.totalorder %s48, %s49
      %p60 = scmp.eq.s32.totalorder %s26, 0
      %p61 = por %p59, %p60
      %p62 = scmp.ne.s32.totalorder %s48, %s49
      %p63 = scmp.eq.s32.totalorder %s27, 3
      %p64 = por %p62, %p63
      %p66 = scmp.ne.s32.totalorder %s49, %s65
      %p67 = scmp.eq.s32.totalorder %s27, 0
      %p68 = por %p66, %p67
      %s69 = ssub.s32 %s28, %s40
      %p70 = scmp.eq.s32.totalorder %s69, 0
      %s72 = sadd.s32 %s71, 1
      %s73 = scalar_select %p70, %s71, %s72
      %p76 = pneg %p70
      %p77 = scmp.eq.s32.totalorder %s21, 3
      %p78 = por %p76, %p77
      %p79 = scmp.ne.s32.totalorder %s71, %s74
      %p80 = scmp.eq.s32.totalorder %s21, 0
      %p81 = por %p79, %p80
      %p82 = scmp.ne.s32.totalorder %s71, %s74
      %p83 = scmp.eq.s32.totalorder %s26, 3
      %p84 = por %p82, %p83
      %p85 = scmp.ne.s32.totalorder %s74, %s75
      %p86 = scmp.eq.s32.totalorder %s26, 0
      %p87 = por %p85, %p86
      %p88 = scmp.ne.s32.totalorder %s74, %s75
      %p89 = scmp.eq.s32.totalorder %s27, 3
      %p90 = por %p88, %p89
      %p92 = scmp.ne.s32.totalorder %s75, %s91
      %p93 = scmp.eq.s32.totalorder %s27, 0
      %p94 = por %p92, %p93
      %s96 = sadd.s32 %s95, 1
      %p99 = scmp.eq.s32.totalorder %s21, 3
      %p100 = scmp.ne.s32.totalorder %s95, %s97
      %p101 = scmp.eq.s32.totalorder %s21, 0
      %p102 = por %p100, %p101
      %p103 = scmp.ne.s32.totalorder %s95, %s97
      %p104 = scmp.eq.s32.totalorder %s26, 3
      %p105 = por %p103, %p104
      %p106 = scmp.ne.s32.totalorder %s97, %s98
      %p107 = scmp.eq.s32.totalorder %s26, 0
      %p108 = por %p106, %p107
      %p109 = scmp.ne.s32.totalorder %s97, %s98
      %p110 = scmp.eq.s32.totalorder %s27, 3
      %p111 = por %p109, %p110
      %p113 = scmp.ne.s32.totalorder %s98, %s112
      %p114 = scmp.eq.s32.totalorder %s27, 0
      %p115 = por %p113, %p114
      %s117 = sadd.s32 %s116, 1
      %p120 = scmp.eq.s32.totalorder %s21, 3
      %p121 = scmp.ne.s32.totalorder %s116, %s118
      %p122 = scmp.eq.s32.totalorder %s21, 0
      %p123 = por %p121, %p122
      %p124 = scmp.ne.s32.totalorder %s116, %s118
      %p125 = scmp.eq.s32.totalorder %s26, 3
      %p126 = por %p124, %p125
      %p127 = scmp.ne.s32.totalorder %s118, %s119
      %p128 = scmp.eq.s32.totalorder %s26, 0
      %p129 = por %p127, %p128
      %p130 = scmp.ne.s32.totalorder %s118, %s119
      %p131 = scmp.eq.s32.totalorder %s27, 3
      %p132 = por %p130, %p131
      %p134 = scmp.ne.s32.totalorder %s119, %s133
      %p135 = scmp.eq.s32.totalorder %s27, 0
      %p136 = por %p134, %p135
      %s138 = sadd.s32 %s137, 1
      %p141 = scmp.eq.s32.totalorder %s21, 3
      %p142 = scmp.ne.s32.totalorder %s137, %s139
      %p143 = scmp.eq.s32.totalorder %s21, 0
      %p144 = por %p142, %p143
      %p145 = scmp.ne.s32.totalorder %s137, %s139
      %p146 = scmp.eq.s32.totalorder %s26, 3
      %p147 = por %p145, %p146
      %p148 = scmp.ne.s32.totalorder %s139, %s140
      %p149 = scmp.eq.s32.totalorder %s26, 0
      %p150 = por %p148, %p149
      %p151 = scmp.ne.s32.totalorder %s139, %s140
      %p152 = scmp.eq.s32.totalorder %s27, 3
      %p153 = por %p151, %p152
      %p155 = scmp.ne.s32.totalorder %s140, %s154
      %p156 = scmp.eq.s32.totalorder %s27, 0
      %p157 = por %p155, %p156
      %s159 = sadd.s32 %s158, 1
      %p162 = scmp.eq.s32.totalorder %s21, 3
      %p163 = scmp.ne.s32.totalorder %s158, %s160
      %p164 = scmp.eq.s32.totalorder %s21, 0
      %p165 = por %p163, %p164
      %p166 = scmp.ne.s32.totalorder %s158, %s160
      %p167 = scmp.eq.s32.totalorder %s26, 3
      %p168 = por %p166, %p167
      %p169 = scmp.ne.s32.totalorder %s160, %s161
      %p170 = scmp.eq.s32.totalorder %s26, 0
      %p171 = por %p169, %p170
      %p172 = scmp.ne.s32.totalorder %s160, %s161
      %p173 = scmp.eq.s32.totalorder %s27, 3
      %p174 = por %p172, %p173
      %p176 = scmp.ne.s32.totalorder %s161, %s175
      %p177 = scmp.eq.s32.totalorder %s27, 0
      %p178 = por %p176, %p177
      %s179 = ssub.s32 %s28, %s40
      %s180 = ssub.s32 %s29, %s36
      %s181 = sor.u32 %s179, %s180
      %p182 = scmp.eq.s32.totalorder %s181, 0
      %s184 = sadd.s32 %s183, 1
      %s185 = scalar_select %p182, %s183, %s184
      %p188 = pneg %p182
      %p189 = scmp.eq.s32.totalorder %s21, 3
      %p190 = por %p188, %p189
      %p191 = scmp.ne.s32.totalorder %s183, %s186
      %p192 = scmp.eq.s32.totalorder %s21, 0
      %p193 = por %p191, %p192
      %p194 = scmp.ne.s32.totalorder %s183, %s186
      %p195 = scmp.eq.s32.totalorder %s26, 3
      %p196 = por %p194, %p195
      %p197 = scmp.ne.s32.totalorder %s186, %s187
      %p198 = scmp.eq.s32.totalorder %s26, 0
      %p199 = por %p197, %p198
      %p200 = scmp.ne.s32.totalorder %s186, %s187
      %p201 = scmp.eq.s32.totalorder %s27, 3
      %p202 = por %p200, %p201
      %p204 = scmp.ne.s32.totalorder %s187, %s203
      %p205 = scmp.eq.s32.totalorder %s27, 0
      %p206 = por %p204, %p205
      %p207 = scmp.le.s32.totalorder 1, %s21
      %p208 = scmp.lt.s32.totalorder %s21, 5
      %p209 = pnand %p207, %p208
      %p210 = pneg %p209
      // Predicated region
      $region9: #{tpu_custom_call.1} parent=5 // pred_check
        _
      $region10: #{tpu_custom_call.1} parent=5 // pred_check_branch
        %212 = sbr.rel (%p209) target = $region12
      $region11: #{tpu_custom_call.1} parent=5 // pred_region
        %s213 = ssub.s32 %s21, 1
        // Predicated region
        $region13: #{tpu_custom_call.1} parent=11 // pred_check
          %p214 = pneg %p108
        $region14: #{tpu_custom_call.1} parent=11 // pred_check_branch
          %216 = sbr.rel (%p214) target = $region16
        $region15: #{tpu_custom_call.1} parent=11 // pred_region
          _
        $region16: #{tpu_custom_call.1} parent=11 // pred_fallthru
          _
        // Predicated region
        $region17: #{tpu_custom_call.1} parent=11 // pred_check
          %p217 = pneg %p129
        $region18: #{tpu_custom_call.1} parent=11 // pred_check_branch
          %219 = sbr.rel (%p217) target = $region20
        $region19: #{tpu_custom_call.1} parent=11 // pred_region
          _
        $region20: #{tpu_custom_call.1} parent=11 // pred_fallthru
          _
        // Predicated region
        $region21: #{tpu_custom_call.1} parent=11 // pred_check
          %p220 = pneg %p150
        $region22: #{tpu_custom_call.1} parent=11 // pred_check_branch
          %222 = sbr.rel (%p220) target = $region24
        $region23: #{tpu_custom_call.1} parent=11 // pred_region
          _
        $region24: #{tpu_custom_call.1} parent=11 // pred_fallthru
          _
        // Predicated region
        $region25: #{tpu_custom_call.1} parent=11 // pred_check
          %p223 = pneg %p171
        $region26: #{tpu_custom_call.1} parent=11 // pred_check_branch
          %225 = sbr.rel (%p223) target = $region28
        $region27: #{tpu_custom_call.1} parent=11 // pred_region
          _
        $region28: #{tpu_custom_call.1} parent=11 // pred_fallthru
          _
      $region12: #{tpu_custom_call.1} parent=5 // pred_fallthru
        _
      %p226 = scmp.lt.s32.totalorder %s21, 4
      // Predicated region
      $region29: #{tpu_custom_call.1} parent=5 // pred_check
        %p227 = pneg %p226
      $region30: #{tpu_custom_call.1} parent=5 // pred_check_branch
        %229 = sbr.rel (%p227) target = $region32
      $region31: #{tpu_custom_call.1} parent=5 // pred_region
        // Predicated region
        $region33: #{tpu_custom_call.1} parent=31 // pred_check
          %p230 = pneg %p55
        $region34: #{tpu_custom_call.1} parent=31 // pred_check_branch
          %232 = sbr.rel (%p230) target = $region36
        $region35: #{tpu_custom_call.1} parent=31 // pred_region
          %s233 = sand.u32 %s45, 1
          %s234 = scalar_lea.sflag [#allocation5], %s233
          %s235 = sand.u32 %s45, 1
          %s236 = smul.addr %s235, 8
          %s237 = scalar_lea.vmem [#allocation4], %s236
          %s239 = ssub.s32 128, 128
          %240 = vsyncadd %s234, %s239
          %s241 = smul.addr %s28, 2
          %s242 = sadd.s32 %s29, %s241
          %s243 = smul.addr %s242, 128
          %s244 = scalar_lea.hbm %s0, %s243
          %s246 = sshll.u32 %s237, 4
          %s247 = int_to_ptr.vmem [resolvable:$true] %s246
          %249 = dma.hbm_to_vmem [thread:$0]  %s244, 128, %s247, %s234
        $region36: #{tpu_custom_call.1} parent=31 // pred_fallthru
          _
        // Predicated region
        $region37: #{tpu_custom_call.1} parent=31 // pred_check
          %p250 = pneg %p81
        $region38: #{tpu_custom_call.1} parent=31 // pred_check_branch
          %252 = sbr.rel (%p250) target = $region40
        $region39: #{tpu_custom_call.1} parent=31 // pred_region
          %s253 = sand.u32 %s71, 1
          %s254 = scalar_lea.sflag [#allocation8], %s253
          %s255 = sand.u32 %s71, 1
          %s256 = smul.addr %s255, 16
          %s257 = scalar_lea.vmem [#allocation7], %s256
          %s259 = ssub.s32 256, 256
          %260 = vsyncadd %s254, %s259
          %s261 = smul.addr %s28, 2
          %s262 = smul.addr %s261, 128
          %s263 = scalar_lea.hbm %s1, %s262
          %s264 = sshll.u32 %s257, 4
          %s265 = int_to_ptr.vmem [resolvable:$true] %s264
          %270 = dma.hbm_to_vmem [thread:$0]  %s263, 256, %s265, %s254, 128, 128, 8
        $region40: #{tpu_custom_call.1} parent=31 // pred_fallthru
          _
      $region32: #{tpu_custom_call.1} parent=5 // pred_fallthru
        _
      %p271 = scmp.le.s32.totalorder 1, %s21
      %p272 = scmp.lt.s32.totalorder %s21, 5
      %p273 = pnand %p271, %p272
      %p274 = pneg %p273
      // Predicated region
      $region41: #{tpu_custom_call.1} parent=5 // pred_check
        _
      $region42: #{tpu_custom_call.1} parent=5 // pred_check_branch
        %276 = sbr.rel (%p273) target = $region44
      $region43: #{tpu_custom_call.1} parent=5 // pred_region
        %s277 = ssub.s32 %s21, 1
        %s278 = sand.u32 %s48, 1
        %s279 = scalar_lea.sflag [#allocation5], %s278
        %s280 = sand.u32 %s48, 1
        %s281 = smul.addr %s280, 8
        %s282 = scalar_lea.vmem [#allocation4], %s281
        // Predicated region
        $region45: #{tpu_custom_call.1} parent=43 // pred_check
          %p283 = pneg %p61
        $region46: #{tpu_custom_call.1} parent=43 // pred_check_branch
          %285 = sbr.rel (%p283) target = $region48
        $region47: #{tpu_custom_call.1} parent=43 // pred_region
          %286 = dma.done %s279, 128
        $region48: #{tpu_custom_call.1} parent=43 // pred_fallthru
          _
        %s287 = sand.u32 %s74, 1
        %s288 = scalar_lea.sflag [#allocation8], %s287
        %s289 = sand.u32 %s74, 1
        %s290 = smul.addr %s289, 16
        %s291 = scalar_lea.vmem [#allocation7], %s290
        // Predicated region
        $region49: #{tpu_custom_call.1} parent=43 // pred_check
          %p292 = pneg %p87
        $region50: #{tpu_custom_call.1} parent=43 // pred_check_branch
          %294 = sbr.rel (%p292) target = $region52
        $region51: #{tpu_custom_call.1} parent=43 // pred_region
          %295 = dma.done %s288, 256
        $region52: #{tpu_custom_call.1} parent=43 // pred_fallthru
          _
        %s296 = sand.u32 %s48, 1
        %s297 = scalar_lea.sflag [#allocation5], %s296
        %s298 = sand.u32 %s48, 1
        %s299 = smul.addr %s298, 8
        %s300 = scalar_lea.vmem [#allocation4], %s299
        %p301 = pneg %p61
        %p302 = pneg %p58
        %s303 = sand.u32 %s74, 1
        %s304 = scalar_lea.sflag [#allocation8], %s303
        %s305 = sand.u32 %s74, 1
        %s306 = smul.addr %s305, 16
        %s307 = scalar_lea.vmem [#allocation7], %s306
        %p308 = pneg %p87
        %p309 = pneg %p84
        %p310 = pneg %p108
        %p311 = pneg %p105
        %p312 = pneg %p129
        %p313 = pneg %p126
        %p314 = pneg %p150
        %p315 = pneg %p147
        %p316 = pneg %p171
        %p317 = pneg %p168
        %p318 = pneg %p199
        %p319 = pneg %p196
        %s320 = sand.u32 %s186, 1
        %s321 = scalar_lea.sflag [#allocation6], %s320
        %s322 = sand.u32 %s186, 1
        %s323 = smul.addr %s322, 8
        %s324 = scalar_lea.vmem [#allocation9], %s323
        %p326 = scmp.eq.s32.totalorder %s31, 0
        // Predicated region
        $region53: #{tpu_custom_call.1} parent=43 // pred_check
          %p327 = pneg %p326
        $region54: #{tpu_custom_call.1} parent=43 // pred_check_branch
          %329 = sbr.rel (%p327) target = $region56
        $region55: #{tpu_custom_call.1} parent=43 // pred_region
          %v330 = vld [vmem:[%s291] sm:$0xff]
          %v331 = vld [vmem:[%s291 + $0x8] sm:$0xff]
          %v332 = vpack.c.bf16 %v331, %v330
          %v333 = vld [vmem:[%s3] sm:$0xff]
          %v334 = vld [vmem:[%s3 + $0x8] sm:$0xff]
          %v335 = vld [vmem:[%s3 + $0x10] sm:$0xff]
          %v336 = vld [vmem:[%s3 + $0x18] sm:$0xff]
          %v337 = vld [vmem:[%s3 + $0x20] sm:$0xff]
          %v338 = vld [vmem:[%s3 + $0x28] sm:$0xff]
          %v339 = vld [vmem:[%s3 + $0x30] sm:$0xff]
          %v340 = vld [vmem:[%s3 + $0x38] sm:$0xff]
          %v341 = vld [vmem:[%s3 + $0x40] sm:$0xff]
          %v342 = vld [vmem:[%s3 + $0x48] sm:$0xff]
          %v343 = vld [vmem:[%s3 + $0x50] sm:$0xff]
          %v344 = vld [vmem:[%s3 + $0x58] sm:$0xff]
          %v345 = vld [vmem:[%s3 + $0x60] sm:$0xff]
          %v346 = vld [vmem:[%s3 + $0x68] sm:$0xff]
          %v347 = vld [vmem:[%s3 + $0x70] sm:$0xff]
          %v348 = vld [vmem:[%s3 + $0x78] sm:$0xff]
          %v349 = vld [vmem:[%s3 + $0x80] sm:$0xff]
          %v350 = vld [vmem:[%s3 + $0x88] sm:$0xff]
          %v351 = vld [vmem:[%s3 + $0x90] sm:$0xff]
          %v352 = vld [vmem:[%s3 + $0x98] sm:$0xff]
          %v353 = vld [vmem:[%s3 + $0xa0] sm:$0xff]
          %v354 = vld [vmem:[%s3 + $0xa8] sm:$0xff]
          %v355 = vld [vmem:[%s3 + $0xb0] sm:$0xff]
          %v356 = vld [vmem:[%s3 + $0xb8] sm:$0xff]
          %v357 = vld [vmem:[%s3 + $0xc0] sm:$0xff]
          %v358 = vld [vmem:[%s3 + $0xc8] sm:$0xff]
          %v359 = vld [vmem:[%s3 + $0xd0] sm:$0xff]
          %v360 = vld [vmem:[%s3 + $0xd8] sm:$0xff]
          %v361 = vld [vmem:[%s3 + $0xe0] sm:$0xff]
          %v362 = vld [vmem:[%s3 + $0xe8] sm:$0xff]
          %v363 = vld [vmem:[%s3 + $0xf0] sm:$0xff]
          %v364 = vld [vmem:[%s3 + $0xf8] sm:$0xff]
          %v397 = vunpack.c.l.b16 %v333
          %v398 = vunpack.c.h.b16 %v333
          %v399 = vunpack.c.l.b16 %v334
          %v400 = vunpack.c.h.b16 %v334
          %v401 = vunpack.c.l.b16 %v335
          %v402 = vunpack.c.h.b16 %v335
          %v403 = vunpack.c.l.b16 %v336
          %v404 = vunpack.c.h.b16 %v336
          %v405 = vunpack.c.l.b16 %v337
          %v406 = vunpack.c.h.b16 %v337
          %v407 = vunpack.c.l.b16 %v338
          %v408 = vunpack.c.h.b16 %v338
          %v409 = vunpack.c.l.b16 %v339
          %v410 = vunpack.c.h.b16 %v339
          %v411 = vunpack.c.l.b16 %v340
          %v412 = vunpack.c.h.b16 %v340
          %v413 = vunpack.c.l.b16 %v341
          %v414 = vunpack.c.h.b16 %v341
          %v415 = vunpack.c.l.b16 %v342
          %v416 = vunpack.c.h.b16 %v342
          %v417 = vunpack.c.l.b16 %v343
          %v418 = vunpack.c.h.b16 %v343
          %v419 = vunpack.c.l.b16 %v344
          %v420 = vunpack.c.h.b16 %v344
          %v421 = vunpack.c.l.b16 %v345
          %v422 = vunpack.c.h.b16 %v345
          %v423 = vunpack.c.l.b16 %v346
          %v424 = vunpack.c.h.b16 %v346
          %v425 = vunpack.c.l.b16 %v347
          %v426 = vunpack.c.h.b16 %v347
          %v427 = vunpack.c.l.b16 %v348
          %v428 = vunpack.c.h.b16 %v348
          %v429 = vunpack.c.l.b16 %v349
          %v430 = vunpack.c.h.b16 %v349
          %v431 = vunpack.c.l.b16 %v350
          %v432 = vunpack.c.h.b16 %v350
          %v433 = vunpack.c.l.b16 %v351
          %v434 = vunpack.c.h.b16 %v351
          %v435 = vunpack.c.l.b16 %v352
          %v436 = vunpack.c.h.b16 %v352
          %v437 = vunpack.c.l.b16 %v353
          %v438 = vunpack.c.h.b16 %v353
          %v439 = vunpack.c.l.b16 %v354
          %v440 = vunpack.c.h.b16 %v354
          %v441 = vunpack.c.l.b16 %v355
          %v442 = vunpack.c.h.b16 %v355
          %v443 = vunpack.c.l.b16 %v356
          %v444 = vunpack.c.h.b16 %v356
          %v445 = vunpack.c.l.b16 %v357
          %v446 = vunpack.c.h.b16 %v357
          %v447 = vunpack.c.l.b16 %v358
          %v448 = vunpack.c.h.b16 %v358
          %v449 = vunpack.c.l.b16 %v359
          %v450 = vunpack.c.h.b16 %v359
          %v451 = vunpack.c.l.b16 %v360
          %v452 = vunpack.c.h.b16 %v360
          %v453 = vunpack.c.l.b16 %v361
          %v454 = vunpack.c.h.b16 %v361
          %v455 = vunpack.c.l.b16 %v362
          %v456 = vunpack.c.h.b16 %v362
          %v457 = vunpack.c.l.b16 %v363
          %v458 = vunpack.c.h.b16 %v363
          %v459 = vunpack.c.l.b16 %v364
          %v460 = vunpack.c.h.b16 %v364
          %v461 = vpack.c.b16 %v405, %v397
          %v462 = vpack.c.b16 %v406, %v398
          %v463 = vpack.c.b16 %v407, %v399
          %v464 = vpack.c.b16 %v408, %v400
          %v465 = vpack.c.b16 %v409, %v401
          %v466 = vpack.c.b16 %v410, %v402
          %v467 = vpack.c.b16 %v411, %v403
          %v468 = vpack.c.b16 %v412, %v404
          %v469 = vpack.c.b16 %v421, %v413
          %v470 = vpack.c.b16 %v422, %v414
          %v471 = vpack.c.b16 %v423, %v415
          %v472 = vpack.c.b16 %v424, %v416
          %v473 = vpack.c.b16 %v425, %v417
          %v474 = vpack.c.b16 %v426, %v418
          %v475 = vpack.c.b16 %v427, %v419
          %v476 = vpack.c.b16 %v428, %v420
          %v477 = vpack.c.b16 %v437, %v429
          %v478 = vpack.c.b16 %v438, %v430
          %v479 = vpack.c.b16 %v439, %v431
          %v480 = vpack.c.b16 %v440, %v432
          %v481 = vpack.c.b16 %v441, %v433
          %v482 = vpack.c.b16 %v442, %v434
          %v483 = vpack.c.b16 %v443, %v435
          %v484 = vpack.c.b16 %v444, %v436
          %v485 = vpack.c.b16 %v453, %v445
          %v486 = vpack.c.b16 %v454, %v446
          %v487 = vpack.c.b16 %v455, %v447
          %v488 = vpack.c.b16 %v456, %v448
          %v489 = vpack.c.b16 %v457, %v449
          %v490 = vpack.c.b16 %v458, %v450
          %v491 = vpack.c.b16 %v459, %v451
          %v492 = vpack.c.b16 %v460, %v452
          %vm525 = vcmask 523264
          %v527 = vsel %vm525, %v332, 0
          %529 = vmatprep.subr.bf16.mxu0 %v462
          %530 = vmatpush1.bf16.msra.mxu0 %v461
          %531 = vmatprep.subr.bf16.mxu0 %v470
          %532 = vmatpush1.bf16.msra.mxu0 %v469
          %533 = vmatprep.subr.bf16.mxu0 %v478
          %534 = vmatpush1.bf16.msra.mxu0 %v477
          %535 = vmatprep.subr.bf16.mxu0 %v486
          %536 = vmatpush1.bf16.msra.mxu0 %v485
          %537 = vmatprep.subr.bf16.mxu0 0
          %538 = vmatpush1.bf16.msra.mxu0 0
          %539 = vmatprep.subr.bf16.mxu0 0
          %540 = vmatpush1.bf16.msra.mxu0 0
          %541 = vmatprep.subr.bf16.mxu0 0
          %542 = vmatpush1.bf16.msra.mxu0 0
          %543 = vmatprep.subr.bf16.mxu0 0
          %544 = vmatpush1.bf16.msra.mxu0 0
          %545 = vmatprep.subr.bf16.mxu0 0
          %546 = vmatpush1.bf16.msra.mxu0 0
          %547 = vmatprep.subr.bf16.mxu0 0
          %548 = vmatpush1.bf16.msra.mxu0 0
          %549 = vmatprep.subr.bf16.mxu0 0
          %550 = vmatpush1.bf16.msra.mxu0 0
          %551 = vmatprep.subr.bf16.mxu0 0
          %552 = vmatpush1.bf16.msra.mxu0 0
          %553 = vmatprep.subr.bf16.mxu0 0
          %554 = vmatpush1.bf16.msra.mxu0 0
          %555 = vmatprep.subr.bf16.mxu0 0
          %556 = vmatpush1.bf16.msra.mxu0 0
          %557 = vmatprep.subr.bf16.mxu0 0
          %558 = vmatpush1.bf16.msra.mxu0 0
          %559 = vmatprep.subr.bf16.mxu0 0
          %560 = vmatpush1.bf16.msra.mxu0 0
          %561 = vmatprep.mubr.bf16.mxu0 0
          %562 = vmatmul.mubr.bf16.gmra.mrb[0].mxu0 %v527
          %v563 = vpop.f32.mrb[0].mxu0
          %v564 = vadd.f32 0.0, %v563
          %v565 = vpop.f32.mrb[0].mxu0
          %v566 = vadd.f32 0.0, %v565
          %v567 = vpop.f32.mrb[0].mxu0
          %v568 = vadd.f32 0.0, %v567
          %v569 = vpop.f32.mrb[0].mxu0
          %v570 = vadd.f32 0.0, %v569
          %571 = vdwg.mxu0
          %572 = vmatprep.subr.bf16.mxu0 %v464
          %573 = vmatpush1.bf16.msra.mxu0 %v463
          %574 = vmatprep.subr.bf16.mxu0 %v472
          %575 = vmatpush1.bf16.msra.mxu0 %v471
          %576 = vmatprep.subr.bf16.mxu0 %v480
          %577 = vmatpush1.bf16.msra.mxu0 %v479
          %578 = vmatprep.subr.bf16.mxu0 %v488
          %579 = vmatpush1.bf16.msra.mxu0 %v487
          %580 = vmatprep.subr.bf16.mxu0 0
          %581 = vmatpush1.bf16.msra.mxu0 0
          %582 = vmatprep.subr.bf16.mxu0 0
          %583 = vmatpush1.bf16.msra.mxu0 0
          %584 = vmatprep.subr.bf16.mxu0 0
          %585 = vmatpush1.bf16.msra.mxu0 0
          %586 = vmatprep.subr.bf16.mxu0 0
          %587 = vmatpush1.bf16.msra.mxu0 0
          %588 = vmatprep.subr.bf16.mxu0 0
          %589 = vmatpush1.bf16.msra.mxu0 0
          %590 = vmatprep.subr.bf16.mxu0 0
          %591 = vmatpush1.bf16.msra.mxu0 0
          %592 = vmatprep.subr.bf16.mxu0 0
          %593 = vmatpush1.bf16.msra.mxu0 0
          %594 = vmatprep.subr.bf16.mxu0 0
          %595 = vmatpush1.bf16.msra.mxu0 0
          %596 = vmatprep.subr.bf16.mxu0 0
          %597 = vmatpush1.bf16.msra.mxu0 0
          %598 = vmatprep.subr.bf16.mxu0 0
          %599 = vmatpush1.bf16.msra.mxu0 0
          %600 = vmatprep.subr.bf16.mxu0 0
          %601 = vmatpush1.bf16.msra.mxu0 0
          %602 = vmatprep.subr.bf16.mxu0 0
          %603 = vmatpush1.bf16.msra.mxu0 0
          %604 = vmatprep.mubr.bf16.mxu0 0
          %605 = vmatmul.mubr.bf16.gmra.mrb[0].mxu0 %v527
          %v606 = vpop.f32.mrb[0].mxu0
          %v607 = vadd.f32 0.0, %v606
          %v608 = vpop.f32.mrb[0].mxu0
          %v609 = vadd.f32 0.0, %v608
          %v610 = vpop.f32.mrb[0].mxu0
          %v611 = vadd.f32 0.0, %v610
          %v612 = vpop.f32.mrb[0].mxu0
          %v613 = vadd.f32 0.0, %v612
          %614 = vdwg.mxu0
          %615 = vmatprep.subr.bf16.mxu0 %v466
          %616 = vmatpush1.bf16.msra.mxu0 %v465
          %617 = vmatprep.subr.bf16.mxu0 %v474
          %618 = vmatpush1.bf16.msra.mxu0 %v473
          %619 = vmatprep.subr.bf16.mxu0 %v482
          %620 = vmatpush1.bf16.msra.mxu0 %v481
          %621 = vmatprep.subr.bf16.mxu0 %v490
          %622 = vmatpush1.bf16.msra.mxu0 %v489
          %623 = vmatprep.subr.bf16.mxu0 0
          %624 = vmatpush1.bf16.msra.mxu0 0
          %625 = vmatprep.subr.bf16.mxu0 0
          %626 = vmatpush1.bf16.msra.mxu0 0
          %627 = vmatprep.subr.bf16.mxu0 0
          %628 = vmatpush1.bf16.msra.mxu0 0
          %629 = vmatprep.subr.bf16.mxu0 0
          %630 = vmatpush1.bf16.msra.mxu0 0
          %631 = vmatprep.subr.bf16.mxu0 0
          %632 = vmatpush1.bf16.msra.mxu0 0
          %633 = vmatprep.subr.bf16.mxu0 0
          %634 = vmatpush1.bf16.msra.mxu0 0
          %635 = vmatprep.subr.bf16.mxu0 0
          %636 = vmatpush1.bf16.msra.mxu0 0
          %637 = vmatprep.subr.bf16.mxu0 0
          %638 = vmatpush1.bf16.msra.mxu0 0
          %639 = vmatprep.subr.bf16.mxu0 0
          %640 = vmatpush1.bf16.msra.mxu0 0
          %641 = vmatprep.subr.bf16.mxu0 0
          %642 = vmatpush1.bf16.msra.mxu0 0
          %643 = vmatprep.subr.bf16.mxu0 0
          %644 = vmatpush1.bf16.msra.mxu0 0
          %645 = vmatprep.subr.bf16.mxu0 0
          %646 = vmatpush1.bf16.msra.mxu0 0
          %647 = vmatprep.mubr.bf16.mxu0 0
          %648 = vmatmul.mubr.bf16.gmra.mrb[0].mxu0 %v527
          %v649 = vpop.f32.mrb[0].mxu0
          %v650 = vadd.f32 0.0, %v649
          %v651 = vpop.f32.mrb[0].mxu0
          %v652 = vadd.f32 0.0, %v651
          %v653 = vpop.f32.mrb[0].mxu0
          %v654 = vadd.f32 0.0, %v653
          %v655 = vpop.f32.mrb[0].mxu0
          %v656 = vadd.f32 0.0, %v655
          %657 = vdwg.mxu0
          %658 = vmatprep.subr.bf16.mxu0 %v468
          %659 = vmatpush1.bf16.msra.mxu0 %v467
          %660 = vmatprep.subr.bf16.mxu0 %v476
          %661 = vmatpush1.bf16.msra.mxu0 %v475
          %662 = vmatprep.subr.bf16.mxu0 %v484
          %663 = vmatpush1.bf16.msra.mxu0 %v483
          %664 = vmatprep.subr.bf16.mxu0 %v492
          %665 = vmatpush1.bf16.msra.mxu0 %v491
          %666 = vmatprep.subr.bf16.mxu0 0
          %667 = vmatpush1.bf16.msra.mxu0 0
          %668 = vmatprep.subr.bf16.mxu0 0
          %669 = vmatpush1.bf16.msra.mxu0 0
          %670 = vmatprep.subr.bf16.mxu0 0
          %671 = vmatpush1.bf16.msra.mxu0 0
          %672 = vmatprep.subr.bf16.mxu0 0
          %673 = vmatpush1.bf16.msra.mxu0 0
          %674 = vmatprep.subr.bf16.mxu0 0
          %675 = vmatpush1.bf16.msra.mxu0 0
          %676 = vmatprep.subr.bf16.mxu0 0
          %677 = vmatpush1.bf16.msra.mxu0 0
          %678 = vmatprep.subr.bf16.mxu0 0
          %679 = vmatpush1.bf16.msra.mxu0 0
          %680 = vmatprep.subr.bf16.mxu0 0
          %681 = vmatpush1.bf16.msra.mxu0 0
          %682 = vmatprep.subr.bf16.mxu0 0
          %683 = vmatpush1.bf16.msra.mxu0 0
          %684 = vmatprep.subr.bf16.mxu0 0
          %685 = vmatpush1.bf16.msra.mxu0 0
          %686 = vmatprep.subr.bf16.mxu0 0
          %687 = vmatpush1.bf16.msra.mxu0 0
          %688 = vmatprep.subr.bf16.mxu0 0
          %689 = vmatpush1.bf16.msra.mxu0 0
          %690 = vmatprep.mubr.bf16.mxu0 0
          %691 = vmatmul.mubr.bf16.gmra.mrb[0].mxu0 %v527
          %v692 = vpop.f32.mrb[0].mxu0
          %v693 = vadd.f32 0.0, %v692
          %v694 = vpop.f32.mrb[0].mxu0
          %v695 = vadd.f32 0.0, %v694
          %v696 = vpop.f32.mrb[0].mxu0
          %v697 = vadd.f32 0.0, %v696
          %v698 = vpop.f32.mrb[0].mxu0
          %v699 = vadd.f32 0.0, %v698
          %700 = vdwg.mxu0
          %v701 = vpack.c.bf16 %v568, %v564
          %v702 = vpack.c.bf16 %v570, %v566
          %v703 = vpack.c.bf16 %v611, %v607
          %v704 = vpack.c.bf16 %v613, %v609
          %705 = vst [vmem:[#allocation2] sm:$0xff] %v701
          %706 = vst [vmem:[#allocation2 + $0x8] sm:$0xff] %v702
          %707 = vst [vmem:[#allocation2 + $0x10] sm:$0xff] %v703
          %708 = vst [vmem:[#allocation2 + $0x18] sm:$0xff] %v704
          %v709 = vpack.c.bf16 %v654, %v650
          %v710 = vpack.c.bf16 %v656, %v652
          %v711 = vpack.c.bf16 %v697, %v693
          %v712 = vpack.c.bf16 %v699, %v695
          %713 = vst [vmem:[#allocation3] sm:$0xff] %v709
          %714 = vst [vmem:[#allocation3 + $0x8] sm:$0xff] %v710
          %715 = vst [vmem:[#allocation3 + $0x10] sm:$0xff] %v711
          %716 = vst [vmem:[#allocation3 + $0x18] sm:$0xff] %v712
        $region56: #{tpu_custom_call.1} parent=43 // pred_fallthru
          _
        %v717 = vld [vmem:[%s282] sm:$0xff]
        %v718 = vpack.c.bf16 %v717, %v717
        %v719 = vld [vmem:[%s2] sm:$0xff]
        %v720 = vld [vmem:[%s2 + $0x8] sm:$0xff]
        %v721 = vld [vmem:[%s2 + $0x10] sm:$0xff]
        %v722 = vld [vmem:[%s2 + $0x18] sm:$0xff]
        %v723 = vld [vmem:[%s2 + $0x20] sm:$0xff]
        %v724 = vld [vmem:[%s2 + $0x28] sm:$0xff]
        %v725 = vld [vmem:[%s2 + $0x30] sm:$0xff]
        %v726 = vld [vmem:[%s2 + $0x38] sm:$0xff]
        %v727 = vld [vmem:[%s2 + $0x40] sm:$0xff]
        %v728 = vld [vmem:[%s2 + $0x48] sm:$0xff]
        %v729 = vld [vmem:[%s2 + $0x50] sm:$0xff]
        %v730 = vld [vmem:[%s2 + $0x58] sm:$0xff]
        %v731 = vld [vmem:[%s2 + $0x60] sm:$0xff]
        %v732 = vld [vmem:[%s2 + $0x68] sm:$0xff]
        %v733 = vld [vmem:[%s2 + $0x70] sm:$0xff]
        %v734 = vld [vmem:[%s2 + $0x78] sm:$0xff]
        %v751 = vunpack.c.l.b16 %v719
        %v752 = vunpack.c.h.b16 %v719
        %v753 = vunpack.c.l.b16 %v720
        %v754 = vunpack.c.h.b16 %v720
        %v755 = vunpack.c.l.b16 %v721
        %v756 = vunpack.c.h.b16 %v721
        %v757 = vunpack.c.l.b16 %v722
        %v758 = vunpack.c.h.b16 %v722
        %v759 = vunpack.c.l.b16 %v723
        %v760 = vunpack.c.h.b16 %v723
        %v761 = vunpack.c.l.b16 %v724
        %v762 = vunpack.c.h.b16 %v724
        %v763 = vunpack.c.l.b16 %v725
        %v764 = vunpack.c.h.b16 %v725
        %v765 = vunpack.c.l.b16 %v726
        %v766 = vunpack.c.h.b16 %v726
        %v767 = vunpack.c.l.b16 %v727
        %v768 = vunpack.c.h.b16 %v727
        %v769 = vunpack.c.l.b16 %v728
        %v770 = vunpack.c.h.b16 %v728
        %v771 = vunpack.c.l.b16 %v729
        %v772 = vunpack.c.h.b16 %v729
        %v773 = vunpack.c.l.b16 %v730
        %v774 = vunpack.c.h.b16 %v730
        %v775 = vunpack.c.l.b16 %v731
        %v776 = vunpack.c.h.b16 %v731
        %v777 = vunpack.c.l.b16 %v732
        %v778 = vunpack.c.h.b16 %v732
        %v779 = vunpack.c.l.b16 %v733
        %v780 = vunpack.c.h.b16 %v733
        %v781 = vunpack.c.l.b16 %v734
        %v782 = vunpack.c.h.b16 %v734
        %v783 = vpack.c.b16 %v755, %v751
        %v784 = vpack.c.b16 %v756, %v752
        %v785 = vpack.c.b16 %v757, %v753
        %v786 = vpack.c.b16 %v758, %v754
        %v787 = vpack.c.b16 %v763, %v759
        %v788 = vpack.c.b16 %v764, %v760
        %v789 = vpack.c.b16 %v765, %v761
        %v790 = vpack.c.b16 %v766, %v762
        %v791 = vpack.c.b16 %v771, %v767
        %v792 = vpack.c.b16 %v772, %v768
        %v793 = vpack.c.b16 %v773, %v769
        %v794 = vpack.c.b16 %v774, %v770
        %v795 = vpack.c.b16 %v779, %v775
        %v796 = vpack.c.b16 %v780, %v776
        %v797 = vpack.c.b16 %v781, %v777
        %v798 = vpack.c.b16 %v782, %v778
        %vm815 = vcmask 523264
        %v817 = vsel %vm815, %v718, 0
        %819 = vmatprep.subr.bf16.mxu0 %v784
        %820 = vmatpush1.bf16.msra.mxu0 %v783
        %821 = vmatprep.subr.bf16.mxu0 %v788
        %822 = vmatpush1.bf16.msra.mxu0 %v787
        %823 = vmatprep.subr.bf16.mxu0 %v792
        %824 = vmatpush1.bf16.msra.mxu0 %v791
        %825 = vmatprep.subr.bf16.mxu0 %v796
        %826 = vmatpush1.bf16.msra.mxu0 %v795
        %827 = vmatprep.subr.bf16.mxu0 0
        %828 = vmatpush1.bf16.msra.mxu0 0
        %829 = vmatprep.subr.bf16.mxu0 0
        %830 = vmatpush1.bf16.msra.mxu0 0
        %831 = vmatprep.subr.bf16.mxu0 0
        %832 = vmatpush1.bf16.msra.mxu0 0
        %833 = vmatprep.subr.bf16.mxu0 0
        %834 = vmatpush1.bf16.msra.mxu0 0
        %835 = vmatprep.subr.bf16.mxu0 0
        %836 = vmatpush1.bf16.msra.mxu0 0
        %837 = vmatprep.subr.bf16.mxu0 0
        %838 = vmatpush1.bf16.msra.mxu0 0
        %839 = vmatprep.subr.bf16.mxu0 0
        %840 = vmatpush1.bf16.msra.mxu0 0
        %841 = vmatprep.subr.bf16.mxu0 0
        %842 = vmatpush1.bf16.msra.mxu0 0
        %843 = vmatprep.subr.bf16.mxu0 0
        %844 = vmatpush1.bf16.msra.mxu0 0
        %845 = vmatprep.subr.bf16.mxu0 0
        %846 = vmatpush1.bf16.msra.mxu0 0
        %847 = vmatprep.subr.bf16.mxu0 0
        %848 = vmatpush1.bf16.msra.mxu0 0
        %849 = vmatprep.subr.bf16.mxu0 0
        %850 = vmatpush1.bf16.msra.mxu0 0
        %851 = vmatprep.mubr.bf16.mxu0 0
        %852 = vmatmul.mubr.bf16.gmra.mrb[0].mxu0 %v817
        %v853 = vpop.f32.mrb[0].mxu0
        %v854 = vadd.f32 0.0, %v853
        %v855 = vpop.f32.mrb[0].mxu0
        %v856 = vadd.f32 0.0, %v855
        %v857 = vpop.f32.mrb[0].mxu0
        %v858 = vpop.f32.mrb[0].mxu0
        %859 = vdwg.mxu0
        %860 = vmatprep.subr.bf16.mxu0 %v786
        %861 = vmatpush1.bf16.msra.mxu0 %v785
        %862 = vmatprep.subr.bf16.mxu0 %v790
        %863 = vmatpush1.bf16.msra.mxu0 %v789
        %864 = vmatprep.subr.bf16.mxu0 %v794
        %865 = vmatpush1.bf16.msra.mxu0 %v793
        %866 = vmatprep.subr.bf16.mxu0 %v798
        %867 = vmatpush1.bf16.msra.mxu0 %v797
        %868 = vmatprep.subr.bf16.mxu0 0
        %869 = vmatpush1.bf16.msra.mxu0 0
        %870 = vmatprep.subr.bf16.mxu0 0
        %871 = vmatpush1.bf16.msra.mxu0 0
        %872 = vmatprep.subr.bf16.mxu0 0
        %873 = vmatpush1.bf16.msra.mxu0 0
        %874 = vmatprep.subr.bf16.mxu0 0
        %875 = vmatpush1.bf16.msra.mxu0 0
        %876 = vmatprep.subr.bf16.mxu0 0
        %877 = vmatpush1.bf16.msra.mxu0 0
        %878 = vmatprep.subr.bf16.mxu0 0
        %879 = vmatpush1.bf16.msra.mxu0 0
        %880 = vmatprep.subr.bf16.mxu0 0
        %881 = vmatpush1.bf16.msra.mxu0 0
        %882 = vmatprep.subr.bf16.mxu0 0
        %883 = vmatpush1.bf16.msra.mxu0 0
        %884 = vmatprep.subr.bf16.mxu0 0
        %885 = vmatpush1.bf16.msra.mxu0 0
        %886 = vmatprep.subr.bf16.mxu0 0
        %887 = vmatpush1.bf16.msra.mxu0 0
        %888 = vmatprep.subr.bf16.mxu0 0
        %889 = vmatpush1.bf16.msra.mxu0 0
        %890 = vmatprep.subr.bf16.mxu0 0
        %891 = vmatpush1.bf16.msra.mxu0 0
        %892 = vmatprep.mubr.bf16.mxu0 0
        %893 = vmatmul.mubr.bf16.gmra.mrb[0].mxu0 %v817
        %v894 = vpop.f32.mrb[0].mxu0
        %v895 = vadd.f32 0.0, %v894
        %v896 = vpop.f32.mrb[0].mxu0
        %v897 = vadd.f32 0.0, %v896
        %v898 = vpop.f32.mrb[0].mxu0
        %v899 = vpop.f32.mrb[0].mxu0
        %900 = vdwg.mxu0
        %v901 = vpack.c.bf16 %v854, %v854
        %v902 = vpack.c.bf16 %v856, %v856
        %v903 = vpack.c.bf16 %v895, %v895
        %v904 = vpack.c.bf16 %v897, %v897
        %s905 = smul.u32 %s31, 8
        %v906 = vlaneseq
        %v907 = vshrl.u32 %v906, 7
        %v908 = vstv %s905
        %v909 = vadd.s32 %v908, %v907
        %v910 = vlaneseq
        %v911 = vand.u32 %v910, 127
        %vm912 = vcmp.le.s32.totalorder %v911, %v909
        %v913 = vld [vmem:[#allocation2] sm:$0xff]
        %v914 = vld [vmem:[#allocation3] sm:$0xff]
        %915 = vmatprep.subr.bf16.mxu0 0
        %916 = vmatpush1.bf16.xpose.msra.mxu0 %v913
        %917 = vmatprep.subr.bf16.mxu0 0
        %918 = vmatpush1.bf16.xpose.msra.mxu0 0
        %919 = vmatprep.subr.bf16.mxu0 0
        %920 = vmatpush1.bf16.xpose.msra.mxu0 0
        %921 = vmatprep.subr.bf16.mxu0 0
        %922 = vmatpush1.bf16.xpose.msra.mxu0 0
        %923 = vmatprep.subr.bf16.mxu0 0
        %924 = vmatpush1.bf16.xpose.msra.mxu0 0
        %925 = vmatprep.subr.bf16.mxu0 0
        %926 = vmatpush1.bf16.xpose.msra.mxu0 0
        %927 = vmatprep.subr.bf16.mxu0 0
        %928 = vmatpush1.bf16.xpose.msra.mxu0 0
        %929 = vmatprep.subr.bf16.mxu0 0
        %930 = vmatpush1.bf16.xpose.msra.mxu0 0
        %931 = vmatprep.subr.bf16.mxu0 0
        %932 = vmatpush1.bf16.xpose.msra.mxu0 0
        %933 = vmatprep.subr.bf16.mxu0 0
        %934 = vmatpush1.bf16.xpose.msra.mxu0 0
        %935 = vmatprep.subr.bf16.mxu0 0
        %936 = vmatpush1.bf16.xpose.msra.mxu0 0
        %937 = vmatprep.subr.bf16.mxu0 0
        %938 = vmatpush1.bf16.xpose.msra.mxu0 0
        %939 = vmatprep.subr.bf16.mxu0 0
        %940 = vmatpush1.bf16.xpose.msra.mxu0 0
        %941 = vmatprep.subr.bf16.mxu0 0
        %942 = vmatpush1.bf16.xpose.msra.mxu0 0
        %943 = vmatprep.subr.bf16.mxu0 0
        %944 = vmatpush1.bf16.xpose.msra.mxu0 0
        %945 = vmatprep.subr.bf16.mxu0 0
        %946 = vmatpush1.bf16.xpose.msra.mxu0 0
        %947 = vmatprep.mubr.bf16.mxu0 0
        %948 = vmatmul.mubr.bf16.gmra.mrb[0].mxu0 %v901
        %v949 = vpop.f32.mrb[0].mxu0
        %v950 = vadd.f32 0.0, %v949
        %v951 = vpop.f32.mrb[0].mxu0
        %v952 = vpop.f32.mrb[0].mxu0
        %v953 = vpop.f32.mrb[0].mxu0
        %954 = vdwg.mxu0
        %v955 = vsel %vm912, %v950, -1e+30
        %vm956 = vcmask 130048
        %v957 = vsel %vm956, %v955, -inf
        %958 = vmax.xlane.f32.xlu0 %v957
        %v959 = vpop.xlane.xlu0 %958
        %v960 = vsub.f32 %v955, %v959
        %v961 = vmul.f32 %v960, 1.442695
        %v962 = vpow.pop %v961
        %v963 = vsel %vm956, %v962, 0.0
        %964 = vadd.xlane.f32.xlu0 %v963
        %v965 = vpop.xlane.xlu0 %964
        %v966 = vrcp.pop %v965
        %v967 = vmul.f32 %v962, %v966
        %v968 = vpack.c.bf16 %v967, %v967
        %v970 = vsel %vm956, %v968, 0
        %972 = vmatprep.subr.bf16.mxu0 0
        %973 = vmatpush1.bf16.msra.mxu0 %v914
        %974 = vmatprep.subr.bf16.mxu0 0
        %975 = vmatpush1.bf16.msra.mxu0 0
        %976 = vmatprep.subr.bf16.mxu0 0
        %977 = vmatpush1.bf16.msra.mxu0 0
        %978 = vmatprep.subr.bf16.mxu0 0
        %979 = vmatpush1.bf16.msra.mxu0 0
        %980 = vmatprep.subr.bf16.mxu0 0
        %981 = vmatpush1.bf16.msra.mxu0 0
        %982 = vmatprep.subr.bf16.mxu0 0
        %983 = vmatpush1.bf16.msra.mxu0 0
        %984 = vmatprep.subr.bf16.mxu0 0
        %985 = vmatpush1.bf16.msra.mxu0 0
        %986 = vmatprep.subr.bf16.mxu0 0
        %987 = vmatpush1.bf16.msra.mxu0 0
        %988 = vmatprep.subr.bf16.mxu0 0
        %989 = vmatpush1.bf16.msra.mxu0 0
        %990 = vmatprep.subr.bf16.mxu0 0
        %991 = vmatpush1.bf16.msra.mxu0 0
        %992 = vmatprep.subr.bf16.mxu0 0
        %993 = vmatpush1.bf16.msra.mxu0 0
        %994 = vmatprep.subr.bf16.mxu0 0
        %995 = vmatpush1.bf16.msra.mxu0 0
        %996 = vmatprep.subr.bf16.mxu0 0
        %997 = vmatpush1.bf16.msra.mxu0 0
        %998 = vmatprep.subr.bf16.mxu0 0
        %999 = vmatpush1.bf16.msra.mxu0 0
        %1000 = vmatprep.subr.bf16.mxu0 0
        %1001 = vmatpush1.bf16.msra.mxu0 0
        %1002 = vmatprep.subr.bf16.mxu0 0
        %1003 = vmatpush1.bf16.msra.mxu0 0
        %1004 = vmatprep.mubr.bf16.mxu0 0
        %1005 = vmatmul.mubr.bf16.gmra.mrb[0].mxu0 %v970
        %v1006 = vpop.f32.mrb[0].mxu0
        %v1007 = vadd.f32 0.0, %v1006
        %v1008 = vpop.f32.mrb[0].mxu0
        %v1009 = vpop.f32.mrb[0].mxu0
        %v1010 = vpop.f32.mrb[0].mxu0
        %1011 = vdwg.mxu0
        %v1012 = vpack.c.bf16 %v1007, %v1007
        %v1013 = vld [vmem:[%s4] sm:$0xf]
        %v1014 = vld [vmem:[%s4 + $0x4] sm:$0xf]
        %v1015 = vld [vmem:[%s4 + $0x8] sm:$0xf]
        %v1016 = vld [vmem:[%s4 + $0xc] sm:$0xf]
        %v1017 = vld [vmem:[%s4 + $0x10] sm:$0xf]
        %v1018 = vld [vmem:[%s4 + $0x14] sm:$0xf]
        %v1019 = vld [vmem:[%s4 + $0x18] sm:$0xf]
        %v1020 = vld [vmem:[%s4 + $0x1c] sm:$0xf]
        %v1021 = vld [vmem:[%s4 + $0x20] sm:$0xf]
        %v1022 = vld [vmem:[%s4 + $0x24] sm:$0xf]
        %v1023 = vld [vmem:[%s4 + $0x28] sm:$0xf]
        %v1024 = vld [vmem:[%s4 + $0x2c] sm:$0xf]
        %v1025 = vld [vmem:[%s4 + $0x30] sm:$0xf]
        %v1026 = vld [vmem:[%s4 + $0x34] sm:$0xf]
        %v1027 = vld [vmem:[%s4 + $0x38] sm:$0xf]
        %v1028 = vld [vmem:[%s4 + $0x3c] sm:$0xf]
        %v1029 = vld [vmem:[#allocation2 + $0x8] sm:$0xff]
        %v1030 = vld [vmem:[#allocation3 + $0x8] sm:$0xff]
        %1031 = vmatprep.subr.bf16.mxu0 0
        %1032 = vmatpush1.bf16.xpose.msra.mxu0 %v1029
        %1033 = vmatprep.subr.bf16.mxu0 0
        %1034 = vmatpush1.bf16.xpose.msra.mxu0 0
        %1035 = vmatprep.subr.bf16.mxu0 0
        %1036 = vmatpush1.bf16.xpose.msra.mxu0 0
        %1037 = vmatprep.subr.bf16.mxu0 0
        %1038 = vmatpush1.bf16.xpose.msra.mxu0 0
        %1039 = vmatprep.subr.bf16.mxu0 0
        %1040 = vmatpush1.bf16.xpose.msra.mxu0 0
        %1041 = vmatprep.subr.bf16.mxu0 0
        %1042 = vmatpush1.bf16.xpose.msra.mxu0 0
        %1043 = vmatprep.subr.bf16.mxu0 0
        %1044 = vmatpush1.bf16.xpose.msra.mxu0 0
        %1045 = vmatprep.subr.bf16.mxu0 0
        %1046 = vmatpush1.bf16.xpose.msra.mxu0 0
        %1047 = vmatprep.subr.bf16.mxu0 0
        %1048 = vmatpush1.bf16.xpose.msra.mxu0 0
        %1049 = vmatprep.subr.bf16.mxu0 0
        %1050 = vmatpush1.bf16.xpose.msra.mxu0 0
        %1051 = vmatprep.subr.bf16.mxu0 0
        %1052 = vmatpush1.bf16.xpose.msra.mxu0 0
        %1053 = vmatprep.subr.bf16.mxu0 0
        %1054 = vmatpush1.bf16.xpose.msra.mxu0 0
        %1055 = vmatprep.subr.bf16.mxu0 0
        %1056 = vmatpush1.bf16.xpose.msra.mxu0 0
        %1057 = vmatprep.subr.bf16.mxu0 0
        %1058 = vmatpush1.bf16.xpose.msra.mxu0 0
        %1059 = vmatprep.subr.bf16.mxu0 0
        %1060 = vmatpush1.bf16.xpose.msra.mxu0 0
        %1061 = vmatprep.subr.bf16.mxu0 0
        %1062 = vmatpush1.bf16.xpose.msra.mxu0 0
        %1063 = vmatprep.mubr.bf16.mxu0 0
        %1064 = vmatmul.mubr.bf16.gmra.mrb[0].mxu0 %v902
        %v1065 = vpop.f32.mrb[0].mxu0
        %v1066 = vadd.f32 0.0, %v1065
        %v1067 = vpop.f32.mrb[0].mxu0
        %v1068 = vpop.f32.mrb[0].mxu0
        %v1069 = vpop.f32.mrb[0].mxu0
        %1070 = vdwg.mxu0
        %v1071 = vsel %vm912, %v1066, -1e+30
        %v1072 = vsel %vm956, %v1071, -inf
        %1073 = vmax.xlane.f32.xlu0 %v1072
        %v1074 = vpop.xlane.xlu0 %1073
        %v1075 = vsub.f32 %v1071, %v1074
        %v1076 = vmul.f32 %v1075, 1.442695
        %v1077 = vpow.pop %v1076
        %v1078 = vsel %vm956, %v1077, 0.0
        %1079 = vadd.xlane.f32.xlu0 %v1078
        %v1080 = vpop.xlane.xlu0 %1079
        %v1081 = vrcp.pop %v1080
        %v1082 = vmul.f32 %v1077, %v1081
        %v1083 = vpack.c.bf16 %v1082, %v1082
        %v1085 = vsel %vm956, %v1083, 0
        %1087 = vmatprep.subr.bf16.mxu0 0
        %1088 = vmatpush1.bf16.msra.mxu0 %v1030
        %1089 = vmatprep.subr.bf16.mxu0 0
        %1090 = vmatpush1.bf16.msra.mxu0 0
        %1091 = vmatprep.subr.bf16.mxu0 0
        %1092 = vmatpush1.bf16.msra.mxu0 0
        %1093 = vmatprep.subr.bf16.mxu0 0
        %1094 = vmatpush1.bf16.msra.mxu0 0
        %1095 = vmatprep.subr.bf16.mxu0 0
        %1096 = vmatpush1.bf16.msra.mxu0 0
        %1097 = vmatprep.subr.bf16.mxu0 0
        %1098 = vmatpush1.bf16.msra.mxu0 0
        %1099 = vmatprep.subr.bf16.mxu0 0
        %1100 = vmatpush1.bf16.msra.mxu0 0
        %1101 = vmatprep.subr.bf16.mxu0 0
        %1102 = vmatpush1.bf16.msra.mxu0 0
        %1103 = vmatprep.subr.bf16.mxu0 0
        %1104 = vmatpush1.bf16.msra.mxu0 0
        %1105 = vmatprep.subr.bf16.mxu0 0
        %1106 = vmatpush1.bf16.msra.mxu0 0
        %1107 = vmatprep.subr.bf16.mxu0 0
        %1108 = vmatpush1.bf16.msra.mxu0 0
        %1109 = vmatprep.subr.bf16.mxu0 0
        %1110 = vmatpush1.bf16.msra.mxu0 0
        %1111 = vmatprep.subr.bf16.mxu0 0
        %1112 = vmatpush1.bf16.msra.mxu0 0
        %1113 = vmatprep.subr.bf16.mxu0 0
        %1114 = vmatpush1.bf16.msra.mxu0 0
        %1115 = vmatprep.subr.bf16.mxu0 0
        %1116 = vmatpush1.bf16.msra.mxu0 0
        %1117 = vmatprep.subr.bf16.mxu0 0
        %1118 = vmatpush1.bf16.msra.mxu0 0
        %1119 = vmatprep.mubr.bf16.mxu0 0
        %1120 = vmatmul.mubr.bf16.gmra.mrb[0].mxu0 %v1085
        %v1121 = vpop.f32.mrb[0].mxu0
        %v1122 = vadd.f32 0.0, %v1121
        %v1123 = vpop.f32.mrb[0].mxu0
        %v1124 = vpop.f32.mrb[0].mxu0
        %v1125 = vpop.f32.mrb[0].mxu0
        %1126 = vdwg.mxu0
        %v1127 = vpack.c.bf16 %v1122, %v1122
        %v1128 = vld [vmem:[%s4 + $0x40] sm:$0xf]
        %v1129 = vld [vmem:[%s4 + $0x44] sm:$0xf]
        %v1130 = vld [vmem:[%s4 + $0x48] sm:$0xf]
        %v1131 = vld [vmem:[%s4 + $0x4c] sm:$0xf]
        %v1132 = vld [vmem:[%s4 + $0x50] sm:$0xf]
        %v1133 = vld [vmem:[%s4 + $0x54] sm:$0xf]
        %v1134 = vld [vmem:[%s4 + $0x58] sm:$0xf]
        %v1135 = vld [vmem:[%s4 + $0x5c] sm:$0xf]
        %v1136 = vld [vmem:[%s4 + $0x60] sm:$0xf]
        %v1137 = vld [vmem:[%s4 + $0x64] sm:$0xf]
        %v1138 = vld [vmem:[%s4 + $0x68] sm:$0xf]
        %v1139 = vld [vmem:[%s4 + $0x6c] sm:$0xf]
        %v1140 = vld [vmem:[%s4 + $0x70] sm:$0xf]
        %v1141 = vld [vmem:[%s4 + $0x74] sm:$0xf]
        %v1142 = vld [vmem:[%s4 + $0x78] sm:$0xf]
        %v1143 = vld [vmem:[%s4 + $0x7c] sm:$0xf]
        %v1160 = vunpack.c.l.b16 %v1128
        %v1161 = vunpack.c.l.b16 %v1129
        %v1162 = vunpack.c.l.b16 %v1130
        %v1163 = vunpack.c.l.b16 %v1131
        %v1164 = vunpack.c.l.b16 %v1132
        %v1165 = vunpack.c.l.b16 %v1133
        %v1166 = vunpack.c.l.b16 %v1134
        %v1167 = vunpack.c.l.b16 %v1135
        %v1168 = vunpack.c.l.b16 %v1136
        %v1169 = vunpack.c.l.b16 %v1137
        %v1170 = vunpack.c.l.b16 %v1138
        %v1171 = vunpack.c.l.b16 %v1139
        %v1172 = vunpack.c.l.b16 %v1140
        %v1173 = vunpack.c.l.b16 %v1141
        %v1174 = vunpack.c.l.b16 %v1142
        %v1175 = vunpack.c.l.b16 %v1143
        %v1176 = vpack.c.b16 %v1161, %v1160
        %v1177 = vpack.c.b16 %v1163, %v1162
        %v1178 = vpack.c.b16 %v1165, %v1164
        %v1179 = vpack.c.b16 %v1167, %v1166
        %v1180 = vpack.c.b16 %v1169, %v1168
        %v1181 = vpack.c.b16 %v1171, %v1170
        %v1182 = vpack.c.b16 %v1173, %v1172
        %v1183 = vpack.c.b16 %v1175, %v1174
        %1192 = vmatprep.subr.bf16.mxu0 0
        %1193 = vmatpush1.bf16.msra.mxu0 %v1176
        %1194 = vmatprep.subr.bf16.mxu0 0
        %1195 = vmatpush1.bf16.msra.mxu0 %v1177
        %1196 = vmatprep.subr.bf16.mxu0 0
        %1197 = vmatpush1.bf16.msra.mxu0 %v1178
        %1198 = vmatprep.subr.bf16.mxu0 0
        %1199 = vmatpush1.bf16.msra.mxu0 %v1179
        %1200 = vmatprep.subr.bf16.mxu0 0
        %1201 = vmatpush1.bf16.msra.mxu0 %v1180
        %1202 = vmatprep.subr.bf16.mxu0 0
        %1203 = vmatpush1.bf16.msra.mxu0 %v1181
        %1204 = vmatprep.subr.bf16.mxu0 0
        %1205 = vmatpush1.bf16.msra.mxu0 %v1182
        %1206 = vmatprep.subr.bf16.mxu0 0
        %1207 = vmatpush1.bf16.msra.mxu0 %v1183
        %1208 = vmatprep.subr.bf16.mxu0 0
        %1209 = vmatpush1.bf16.msra.mxu0 0
        %1210 = vmatprep.subr.bf16.mxu0 0
        %1211 = vmatpush1.bf16.msra.mxu0 0
        %1212 = vmatprep.subr.bf16.mxu0 0
        %1213 = vmatpush1.bf16.msra.mxu0 0
        %1214 = vmatprep.subr.bf16.mxu0 0
        %1215 = vmatpush1.bf16.msra.mxu0 0
        %1216 = vmatprep.subr.bf16.mxu0 0
        %1217 = vmatpush1.bf16.msra.mxu0 0
        %1218 = vmatprep.subr.bf16.mxu0 0
        %1219 = vmatpush1.bf16.msra.mxu0 0
        %1220 = vmatprep.subr.bf16.mxu0 0
        %1221 = vmatpush1.bf16.msra.mxu0 0
        %1222 = vmatprep.subr.bf16.mxu0 0
        %1223 = vmatpush1.bf16.msra.mxu0 0
        %1224 = vmatprep.mubr.bf16.mxu0 0
        %1225 = vmatmul.mubr.bf16.gmra.mrb[0].mxu0 %v1127
        %v1226 = vpop.f32.mrb[0].mxu0
        %v1227 = vadd.f32 0.0, %v1226
        %v1228 = vpop.f32.mrb[0].mxu0
        %v1229 = vpop.f32.mrb[0].mxu0
        %v1230 = vpop.f32.mrb[0].mxu0
        %1231 = vdwg.mxu0
        %v1248 = vunpack.c.l.b16 %v1013
        %v1249 = vunpack.c.l.b16 %v1014
        %v1250 = vunpack.c.l.b16 %v1015
        %v1251 = vunpack.c.l.b16 %v1016
        %v1252 = vunpack.c.l.b16 %v1017
        %v1253 = vunpack.c.l.b16 %v1018
        %v1254 = vunpack.c.l.b16 %v1019
        %v1255 = vunpack.c.l.b16 %v1020
        %v1256 = vunpack.c.l.b16 %v1021
        %v1257 = vunpack.c.l.b16 %v1022
        %v1258 = vunpack.c.l.b16 %v1023
        %v1259 = vunpack.c.l.b16 %v1024
        %v1260 = vunpack.c.l.b16 %v1025
        %v1261 = vunpack.c.l.b16 %v1026
        %v1262 = vunpack.c.l.b16 %v1027
        %v1263 = vunpack.c.l.b16 %v1028
        %v1264 = vpack.c.b16 %v1249, %v1248
        %v1265 = vpack.c.b16 %v1251, %v1250
        %v1266 = vpack.c.b16 %v1253, %v1252
        %v1267 = vpack.c.b16 %v1255, %v1254
        %v1268 = vpack.c.b16 %v1257, %v1256
        %v1269 = vpack.c.b16 %v1259, %v1258
        %v1270 = vpack.c.b16 %v1261, %v1260
        %v1271 = vpack.c.b16 %v1263, %v1262
        %1280 = vmatprep.subr.bf16.mxu0 0
        %1281 = vmatpush1.bf16.msra.mxu0 %v1264
        %1282 = vmatprep.subr.bf16.mxu0 0
        %1283 = vmatpush1.bf16.msra.mxu0 %v1265
        %1284 = vmatprep.subr.bf16.mxu0 0
        %1285 = vmatpush1.bf16.msra.mxu0 %v1266
        %1286 = vmatprep.subr.bf16.mxu0 0
        %1287 = vmatpush1.bf16.msra.mxu0 %v1267
        %1288 = vmatprep.subr.bf16.mxu0 0
        %1289 = vmatpush1.bf16.msra.mxu0 %v1268
        %1290 = vmatprep.subr.bf16.mxu0 0
        %1291 = vmatpush1.bf16.msra.mxu0 %v1269
        %1292 = vmatprep.subr.bf16.mxu0 0
        %1293 = vmatpush1.bf16.msra.mxu0 %v1270
        %1294 = vmatprep.subr.bf16.mxu0 0
        %1295 = vmatpush1.bf16.msra.mxu0 %v1271
        %1296 = vmatprep.subr.bf16.mxu0 0
        %1297 = vmatpush1.bf16.msra.mxu0 0
        %1298 = vmatprep.subr.bf16.mxu0 0
        %1299 = vmatpush1.bf16.msra.mxu0 0
        %1300 = vmatprep.subr.bf16.mxu0 0
        %1301 = vmatpush1.bf16.msra.mxu0 0
        %1302 = vmatprep.subr.bf16.mxu0 0
        %1303 = vmatpush1.bf16.msra.mxu0 0
        %1304 = vmatprep.subr.bf16.mxu0 0
        %1305 = vmatpush1.bf16.msra.mxu0 0
        %1306 = vmatprep.subr.bf16.mxu0 0
        %1307 = vmatpush1.bf16.msra.mxu0 0
        %1308 = vmatprep.subr.bf16.mxu0 0
        %1309 = vmatpush1.bf16.msra.mxu0 0
        %1310 = vmatprep.subr.bf16.mxu0 0
        %1311 = vmatpush1.bf16.msra.mxu0 0
        %1312 = vmatprep.mubr.bf16.mxu0 0
        %1313 = vmatmul.mubr.bf16.gmra.mrb[0].mxu0 %v1012
        %v1314 = vpop.f32.mrb[0].mxu0
        %v1315 = vadd.f32 %v1227, %v1314
        %v1316 = vpop.f32.mrb[0].mxu0
        %v1317 = vpop.f32.mrb[0].mxu0
        %v1318 = vpop.f32.mrb[0].mxu0
        %1319 = vdwg.mxu0
        %v1320 = vld [vmem:[#allocation2 + $0x10] sm:$0xff]
        %v1321 = vld [vmem:[#allocation3 + $0x10] sm:$0xff]
        %1322 = vmatprep.subr.bf16.mxu0 0
        %1323 = vmatpush1.bf16.xpose.msra.mxu0 %v1320
        %1324 = vmatprep.subr.bf16.mxu0 0
        %1325 = vmatpush1.bf16.xpose.msra.mxu0 0
        %1326 = vmatprep.subr.bf16.mxu0 0
        %1327 = vmatpush1.bf16.xpose.msra.mxu0 0
        %1328 = vmatprep.subr.bf16.mxu0 0
        %1329 = vmatpush1.bf16.xpose.msra.mxu0 0
        %1330 = vmatprep.subr.bf16.mxu0 0
        %1331 = vmatpush1.bf16.xpose.msra.mxu0 0
        %1332 = vmatprep.subr.bf16.mxu0 0
        %1333 = vmatpush1.bf16.xpose.msra.mxu0 0
        %1334 = vmatprep.subr.bf16.mxu0 0
        %1335 = vmatpush1.bf16.xpose.msra.mxu0 0
        %1336 = vmatprep.subr.bf16.mxu0 0
        %1337 = vmatpush1.bf16.xpose.msra.mxu0 0
        %1338 = vmatprep.subr.bf16.mxu0 0
        %1339 = vmatpush1.bf16.xpose.msra.mxu0 0
        %1340 = vmatprep.subr.bf16.mxu0 0
        %1341 = vmatpush1.bf16.xpose.msra.mxu0 0
        %1342 = vmatprep.subr.bf16.mxu0 0
        %1343 = vmatpush1.bf16.xpose.msra.mxu0 0
        %1344 = vmatprep.subr.bf16.mxu0 0
        %1345 = vmatpush1.bf16.xpose.msra.mxu0 0
        %1346 = vmatprep.subr.bf16.mxu0 0
        %1347 = vmatpush1.bf16.xpose.msra.mxu0 0
        %1348 = vmatprep.subr.bf16.mxu0 0
        %1349 = vmatpush1.bf16.xpose.msra.mxu0 0
        %1350 = vmatprep.subr.bf16.mxu0 0
        %1351 = vmatpush1.bf16.xpose.msra.mxu0 0
        %1352 = vmatprep.subr.bf16.mxu0 0
        %1353 = vmatpush1.bf16.xpose.msra.mxu0 0
        %1354 = vmatprep.mubr.bf16.mxu0 0
        %1355 = vmatmul.mubr.bf16.gmra.mrb[0].mxu0 %v903
        %v1356 = vpop.f32.mrb[0].mxu0
        %v1357 = vadd.f32 0.0, %v1356
        %v1358 = vpop.f32.mrb[0].mxu0
        %v1359 = vpop.f32.mrb[0].mxu0
        %v1360 = vpop.f32.mrb[0].mxu0
        %1361 = vdwg.mxu0
        %v1362 = vsel %vm912, %v1357, -1e+30
        %v1363 = vsel %vm956, %v1362, -inf
        %1364 = vmax.xlane.f32.xlu0 %v1363
        %v1365 = vpop.xlane.xlu0 %1364
        %v1366 = vsub.f32 %v1362, %v1365
        %v1367 = vmul.f32 %v1366, 1.442695
        %v1368 = vpow.pop %v1367
        %v1369 = vsel %vm956, %v1368, 0.0
        %1370 = vadd.xlane.f32.xlu0 %v1369
        %v1371 = vpop.xlane.xlu0 %1370
        %v1372 = vrcp.pop %v1371
        %v1373 = vmul.f32 %v1368, %v1372
        %v1374 = vpack.c.bf16 %v1373, %v1373
        %v1376 = vsel %vm956, %v1374, 0
        %1378 = vmatprep.subr.bf16.mxu0 0
        %1379 = vmatpush1.bf16.msra.mxu0 %v1321
        %1380 = vmatprep.subr.bf16.mxu0 0
        %1381 = vmatpush1.bf16.msra.mxu0 0
        %1382 = vmatprep.subr.bf16.mxu0 0
        %1383 = vmatpush1.bf16.msra.mxu0 0
        %1384 = vmatprep.subr.bf16.mxu0 0
        %1385 = vmatpush1.bf16.msra.mxu0 0
        %1386 = vmatprep.subr.bf16.mxu0 0
        %1387 = vmatpush1.bf16.msra.mxu0 0
        %1388 = vmatprep.subr.bf16.mxu0 0
        %1389 = vmatpush1.bf16.msra.mxu0 0
        %1390 = vmatprep.subr.bf16.mxu0 0
        %1391 = vmatpush1.bf16.msra.mxu0 0
        %1392 = vmatprep.subr.bf16.mxu0 0
        %1393 = vmatpush1.bf16.msra.mxu0 0
        %1394 = vmatprep.subr.bf16.mxu0 0
        %1395 = vmatpush1.bf16.msra.mxu0 0
        %1396 = vmatprep.subr.bf16.mxu0 0
        %1397 = vmatpush1.bf16.msra.mxu0 0
        %1398 = vmatprep.subr.bf16.mxu0 0
        %1399 = vmatpush1.bf16.msra.mxu0 0
        %1400 = vmatprep.subr.bf16.mxu0 0
        %1401 = vmatpush1.bf16.msra.mxu0 0
        %1402 = vmatprep.subr.bf16.mxu0 0
        %1403 = vmatpush1.bf16.msra.mxu0 0
        %1404 = vmatprep.subr.bf16.mxu0 0
        %1405 = vmatpush1.bf16.msra.mxu0 0
        %1406 = vmatprep.subr.bf16.mxu0 0
        %1407 = vmatpush1.bf16.msra.mxu0 0
        %1408 = vmatprep.subr.bf16.mxu0 0
        %1409 = vmatpush1.bf16.msra.mxu0 0
        %1410 = vmatprep.mubr.bf16.mxu0 0
        %1411 = vmatmul.mubr.bf16.gmra.mrb[0].mxu0 %v1376
        %v1412 = vpop.f32.mrb[0].mxu0
        %v1413 = vadd.f32 0.0, %v1412
        %v1414 = vpop.f32.mrb[0].mxu0
        %v1415 = vpop.f32.mrb[0].mxu0
        %v1416 = vpop.f32.mrb[0].mxu0
        %1417 = vdwg.mxu0
        %v1418 = vpack.c.bf16 %v1413, %v1413
        %v1419 = vld [vmem:[%s4 + $0x80] sm:$0xf]
        %v1420 = vld [vmem:[%s4 + $0x84] sm:$0xf]
        %v1421 = vld [vmem:[%s4 + $0x88] sm:$0xf]
        %v1422 = vld [vmem:[%s4 + $0x8c] sm:$0xf]
        %v1423 = vld [vmem:[%s4 + $0x90] sm:$0xf]
        %v1424 = vld [vmem:[%s4 + $0x94] sm:$0xf]
        %v1425 = vld [vmem:[%s4 + $0x98] sm:$0xf]
        %v1426 = vld [vmem:[%s4 + $0x9c] sm:$0xf]
        %v1427 = vld [vmem:[%s4 + $0xa0] sm:$0xf]
        %v1428 = vld [vmem:[%s4 + $0xa4] sm:$0xf]
        %v1429 = vld [vmem:[%s4 + $0xa8] sm:$0xf]
        %v1430 = vld [vmem:[%s4 + $0xac] sm:$0xf]
        %v1431 = vld [vmem:[%s4 + $0xb0] sm:$0xf]
        %v1432 = vld [vmem:[%s4 + $0xb4] sm:$0xf]
        %v1433 = vld [vmem:[%s4 + $0xb8] sm:$0xf]
        %v1434 = vld [vmem:[%s4 + $0xbc] sm:$0xf]
        %v1451 = vunpack.c.l.b16 %v1419
        %v1452 = vunpack.c.l.b16 %v1420
        %v1453 = vunpack.c.l.b16 %v1421
        %v1454 = vunpack.c.l.b16 %v1422
        %v1455 = vunpack.c.l.b16 %v1423
        %v1456 = vunpack.c.l.b16 %v1424
        %v1457 = vunpack.c.l.b16 %v1425
        %v1458 = vunpack.c.l.b16 %v1426
        %v1459 = vunpack.c.l.b16 %v1427
        %v1460 = vunpack.c.l.b16 %v1428
        %v1461 = vunpack.c.l.b16 %v1429
        %v1462 = vunpack.c.l.b16 %v1430
        %v1463 = vunpack.c.l.b16 %v1431
        %v1464 = vunpack.c.l.b16 %v1432
        %v1465 = vunpack.c.l.b16 %v1433
        %v1466 = vunpack.c.l.b16 %v1434
        %v1467 = vpack.c.b16 %v1452, %v1451
        %v1468 = vpack.c.b16 %v1454, %v1453
        %v1469 = vpack.c.b16 %v1456, %v1455
        %v1470 = vpack.c.b16 %v1458, %v1457
        %v1471 = vpack.c.b16 %v1460, %v1459
        %v1472 = vpack.c.b16 %v1462, %v1461
        %v1473 = vpack.c.b16 %v1464, %v1463
        %v1474 = vpack.c.b16 %v1466, %v1465
        %1483 = vmatprep.subr.bf16.mxu0 0
        %1484 = vmatpush1.bf16.msra.mxu0 %v1467
        %1485 = vmatprep.subr.bf16.mxu0 0
        %1486 = vmatpush1.bf16.msra.mxu0 %v1468
        %1487 = vmatprep.subr.bf16.mxu0 0
        %1488 = vmatpush1.bf16.msra.mxu0 %v1469
        %1489 = vmatprep.subr.bf16.mxu0 0
        %1490 = vmatpush1.bf16.msra.mxu0 %v1470
        %1491 = vmatprep.subr.bf16.mxu0 0
        %1492 = vmatpush1.bf16.msra.mxu0 %v1471
        %1493 = vmatprep.subr.bf16.mxu0 0
        %1494 = vmatpush1.bf16.msra.mxu0 %v1472
        %1495 = vmatprep.subr.bf16.mxu0 0
        %1496 = vmatpush1.bf16.msra.mxu0 %v1473
        %1497 = vmatprep.subr.bf16.mxu0 0
        %1498 = vmatpush1.bf16.msra.mxu0 %v1474
        %1499 = vmatprep.subr.bf16.mxu0 0
        %1500 = vmatpush1.bf16.msra.mxu0 0
        %1501 = vmatprep.subr.bf16.mxu0 0
        %1502 = vmatpush1.bf16.msra.mxu0 0
        %1503 = vmatprep.subr.bf16.mxu0 0
        %1504 = vmatpush1.bf16.msra.mxu0 0
        %1505 = vmatprep.subr.bf16.mxu0 0
        %1506 = vmatpush1.bf16.msra.mxu0 0
        %1507 = vmatprep.subr.bf16.mxu0 0
        %1508 = vmatpush1.bf16.msra.mxu0 0
        %1509 = vmatprep.subr.bf16.mxu0 0
        %1510 = vmatpush1.bf16.msra.mxu0 0
        %1511 = vmatprep.subr.bf16.mxu0 0
        %1512 = vmatpush1.bf16.msra.mxu0 0
        %1513 = vmatprep.subr.bf16.mxu0 0
        %1514 = vmatpush1.bf16.msra.mxu0 0
        %1515 = vmatprep.mubr.bf16.mxu0 0
        %1516 = vmatmul.mubr.bf16.gmra.mrb[0].mxu0 %v1418
        %v1517 = vpop.f32.mrb[0].mxu0
        %v1518 = vadd.f32 0.0, %v1517
        %v1519 = vpop.f32.mrb[0].mxu0
        %v1520 = vpop.f32.mrb[0].mxu0
        %v1521 = vpop.f32.mrb[0].mxu0
        %1522 = vdwg.mxu0
        %v1523 = vadd.f32 %v1315, %v1518
        %v1524 = vld [vmem:[#allocation2 + $0x18] sm:$0xff]
        %v1525 = vld [vmem:[#allocation3 + $0x18] sm:$0xff]
        %1526 = vmatprep.subr.bf16.mxu0 0
        %1527 = vmatpush1.bf16.xpose.msra.mxu0 %v1524
        %1528 = vmatprep.subr.bf16.mxu0 0
        %1529 = vmatpush1.bf16.xpose.msra.mxu0 0
        %1530 = vmatprep.subr.bf16.mxu0 0
        %1531 = vmatpush1.bf16.xpose.msra.mxu0 0
        %1532 = vmatprep.subr.bf16.mxu0 0
        %1533 = vmatpush1.bf16.xpose.msra.mxu0 0
        %1534 = vmatprep.subr.bf16.mxu0 0
        %1535 = vmatpush1.bf16.xpose.msra.mxu0 0
        %1536 = vmatprep.subr.bf16.mxu0 0
        %1537 = vmatpush1.bf16.xpose.msra.mxu0 0
        %1538 = vmatprep.subr.bf16.mxu0 0
        %1539 = vmatpush1.bf16.xpose.msra.mxu0 0
        %1540 = vmatprep.subr.bf16.mxu0 0
        %1541 = vmatpush1.bf16.xpose.msra.mxu0 0
        %1542 = vmatprep.subr.bf16.mxu0 0
        %1543 = vmatpush1.bf16.xpose.msra.mxu0 0
        %1544 = vmatprep.subr.bf16.mxu0 0
        %1545 = vmatpush1.bf16.xpose.msra.mxu0 0
        %1546 = vmatprep.subr.bf16.mxu0 0
        %1547 = vmatpush1.bf16.xpose.msra.mxu0 0
        %1548 = vmatprep.subr.bf16.mxu0 0
        %1549 = vmatpush1.bf16.xpose.msra.mxu0 0
        %1550 = vmatprep.subr.bf16.mxu0 0
        %1551 = vmatpush1.bf16.xpose.msra.mxu0 0
        %1552 = vmatprep.subr.bf16.mxu0 0
        %1553 = vmatpush1.bf16.xpose.msra.mxu0 0
        %1554 = vmatprep.subr.bf16.mxu0 0
        %1555 = vmatpush1.bf16.xpose.msra.mxu0 0
        %1556 = vmatprep.subr.bf16.mxu0 0
        %1557 = vmatpush1.bf16.xpose.msra.mxu0 0
        %1558 = vmatprep.mubr.bf16.mxu0 0
        %1559 = vmatmul.mubr.bf16.gmra.mrb[0].mxu0 %v904
        %v1560 = vpop.f32.mrb[0].mxu0
        %v1561 = vadd.f32 0.0, %v1560
        %v1562 = vpop.f32.mrb[0].mxu0
        %v1563 = vpop.f32.mrb[0].mxu0
        %v1564 = vpop.f32.mrb[0].mxu0
        %1565 = vdwg.mxu0
        %v1566 = vsel %vm912, %v1561, -1e+30
        %v1567 = vsel %vm956, %v1566, -inf
        %1568 = vmax.xlane.f32.xlu0 %v1567
        %v1569 = vpop.xlane.xlu0 %1568
        %v1570 = vsub.f32 %v1566, %v1569
        %v1571 = vmul.f32 %v1570, 1.442695
        %v1572 = vpow.pop %v1571
        %v1573 = vsel %vm956, %v1572, 0.0
        %1574 = vadd.xlane.f32.xlu0 %v1573
        %v1575 = vpop.xlane.xlu0 %1574
        %v1576 = vrcp.pop %v1575
        %v1577 = vmul.f32 %v1572, %v1576
        %v1578 = vpack.c.bf16 %v1577, %v1577
        %v1580 = vsel %vm956, %v1578, 0
        %1582 = vmatprep.subr.bf16.mxu0 0
        %1583 = vmatpush1.bf16.msra.mxu0 %v1525
        %1584 = vmatprep.subr.bf16.mxu0 0
        %1585 = vmatpush1.bf16.msra.mxu0 0
        %1586 = vmatprep.subr.bf16.mxu0 0
        %1587 = vmatpush1.bf16.msra.mxu0 0
        %1588 = vmatprep.subr.bf16.mxu0 0
        %1589 = vmatpush1.bf16.msra.mxu0 0
        %1590 = vmatprep.subr.bf16.mxu0 0
        %1591 = vmatpush1.bf16.msra.mxu0 0
        %1592 = vmatprep.subr.bf16.mxu0 0
        %1593 = vmatpush1.bf16.msra.mxu0 0
        %1594 = vmatprep.subr.bf16.mxu0 0
        %1595 = vmatpush1.bf16.msra.mxu0 0
        %1596 = vmatprep.subr.bf16.mxu0 0
        %1597 = vmatpush1.bf16.msra.mxu0 0
        %1598 = vmatprep.subr.bf16.mxu0 0
        %1599 = vmatpush1.bf16.msra.mxu0 0
        %1600 = vmatprep.subr.bf16.mxu0 0
        %1601 = vmatpush1.bf16.msra.mxu0 0
        %1602 = vmatprep.subr.bf16.mxu0 0
        %1603 = vmatpush1.bf16.msra.mxu0 0
        %1604 = vmatprep.subr.bf16.mxu0 0
        %1605 = vmatpush1.bf16.msra.mxu0 0
        %1606 = vmatprep.subr.bf16.mxu0 0
        %1607 = vmatpush1.bf16.msra.mxu0 0
        %1608 = vmatprep.subr.bf16.mxu0 0
        %1609 = vmatpush1.bf16.msra.mxu0 0
        %1610 = vmatprep.subr.bf16.mxu0 0
        %1611 = vmatpush1.bf16.msra.mxu0 0
        %1612 = vmatprep.subr.bf16.mxu0 0
        %1613 = vmatpush1.bf16.msra.mxu0 0
        %1614 = vmatprep.mubr.bf16.mxu0 0
        %1615 = vmatmul.mubr.bf16.gmra.mrb[0].mxu0 %v1580
        %v1616 = vpop.f32.mrb[0].mxu0
        %v1617 = vadd.f32 0.0, %v1616
        %v1618 = vpop.f32.mrb[0].mxu0
        %v1619 = vpop.f32.mrb[0].mxu0
        %v1620 = vpop.f32.mrb[0].mxu0
        %1621 = vdwg.mxu0
        %v1622 = vpack.c.bf16 %v1617, %v1617
        %v1623 = vld [vmem:[%s4 + $0xc0] sm:$0xf]
        %v1624 = vld [vmem:[%s4 + $0xc4] sm:$0xf]
        %v1625 = vld [vmem:[%s4 + $0xc8] sm:$0xf]
        %v1626 = vld [vmem:[%s4 + $0xcc] sm:$0xf]
        %v1627 = vld [vmem:[%s4 + $0xd0] sm:$0xf]
        %v1628 = vld [vmem:[%s4 + $0xd4] sm:$0xf]
        %v1629 = vld [vmem:[%s4 + $0xd8] sm:$0xf]
        %v1630 = vld [vmem:[%s4 + $0xdc] sm:$0xf]
        %v1631 = vld [vmem:[%s4 + $0xe0] sm:$0xf]
        %v1632 = vld [vmem:[%s4 + $0xe4] sm:$0xf]
        %v1633 = vld [vmem:[%s4 + $0xe8] sm:$0xf]
        %v1634 = vld [vmem:[%s4 + $0xec] sm:$0xf]
        %v1635 = vld [vmem:[%s4 + $0xf0] sm:$0xf]
        %v1636 = vld [vmem:[%s4 + $0xf4] sm:$0xf]
        %v1637 = vld [vmem:[%s4 + $0xf8] sm:$0xf]
        %v1638 = vld [vmem:[%s4 + $0xfc] sm:$0xf]
        %v1655 = vunpack.c.l.b16 %v1623
        %v1656 = vunpack.c.l.b16 %v1624
        %v1657 = vunpack.c.l.b16 %v1625
        %v1658 = vunpack.c.l.b16 %v1626
        %v1659 = vunpack.c.l.b16 %v1627
        %v1660 = vunpack.c.l.b16 %v1628
        %v1661 = vunpack.c.l.b16 %v1629
        %v1662 = vunpack.c.l.b16 %v1630
        %v1663 = vunpack.c.l.b16 %v1631
        %v1664 = vunpack.c.l.b16 %v1632
        %v1665 = vunpack.c.l.b16 %v1633
        %v1666 = vunpack.c.l.b16 %v1634
        %v1667 = vunpack.c.l.b16 %v1635
        %v1668 = vunpack.c.l.b16 %v1636
        %v1669 = vunpack.c.l.b16 %v1637
        %v1670 = vunpack.c.l.b16 %v1638
        %v1671 = vpack.c.b16 %v1656, %v1655
        %v1672 = vpack.c.b16 %v1658, %v1657
        %v1673 = vpack.c.b16 %v1660, %v1659
        %v1674 = vpack.c.b16 %v1662, %v1661
        %v1675 = vpack.c.b16 %v1664, %v1663
        %v1676 = vpack.c.b16 %v1666, %v1665
        %v1677 = vpack.c.b16 %v1668, %v1667
        %v1678 = vpack.c.b16 %v1670, %v1669
        %1687 = vmatprep.subr.bf16.mxu0 0
        %1688 = vmatpush1.bf16.msra.mxu0 %v1671
        %1689 = vmatprep.subr.bf16.mxu0 0
        %1690 = vmatpush1.bf16.msra.mxu0 %v1672
        %1691 = vmatprep.subr.bf16.mxu0 0
        %1692 = vmatpush1.bf16.msra.mxu0 %v1673
        %1693 = vmatprep.subr.bf16.mxu0 0
        %1694 = vmatpush1.bf16.msra.mxu0 %v1674
        %1695 = vmatprep.subr.bf16.mxu0 0
        %1696 = vmatpush1.bf16.msra.mxu0 %v1675
        %1697 = vmatprep.subr.bf16.mxu0 0
        %1698 = vmatpush1.bf16.msra.mxu0 %v1676
        %1699 = vmatprep.subr.bf16.mxu0 0
        %1700 = vmatpush1.bf16.msra.mxu0 %v1677
        %1701 = vmatprep.subr.bf16.mxu0 0
        %1702 = vmatpush1.bf16.msra.mxu0 %v1678
        %1703 = vmatprep.subr.bf16.mxu0 0
        %1704 = vmatpush1.bf16.msra.mxu0 0
        %1705 = vmatprep.subr.bf16.mxu0 0
        %1706 = vmatpush1.bf16.msra.mxu0 0
        %1707 = vmatprep.subr.bf16.mxu0 0
        %1708 = vmatpush1.bf16.msra.mxu0 0
        %1709 = vmatprep.subr.bf16.mxu0 0
        %1710 = vmatpush1.bf16.msra.mxu0 0
        %1711 = vmatprep.subr.bf16.mxu0 0
        %1712 = vmatpush1.bf16.msra.mxu0 0
        %1713 = vmatprep.subr.bf16.mxu0 0
        %1714 = vmatpush1.bf16.msra.mxu0 0
        %1715 = vmatprep.subr.bf16.mxu0 0
        %1716 = vmatpush1.bf16.msra.mxu0 0
        %1717 = vmatprep.subr.bf16.mxu0 0
        %1718 = vmatpush1.bf16.msra.mxu0 0
        %1719 = vmatprep.mubr.bf16.mxu0 0
        %1720 = vmatmul.mubr.bf16.gmra.mrb[0].mxu0 %v1622
        %v1721 = vpop.f32.mrb[0].mxu0
        %v1722 = vadd.f32 0.0, %v1721
        %v1723 = vpop.f32.mrb[0].mxu0
        %v1724 = vpop.f32.mrb[0].mxu0
        %v1725 = vpop.f32.mrb[0].mxu0
        %1726 = vdwg.mxu0
        %v1727 = vadd.f32 %v1523, %v1722
        %v1728 = vld [vmem:[%s5] sm:$0x1]
        %v1730 = vlaneseq
        %v1731 = vshrl.u32 %v1730, 7
        %v1732 = vsub.s32 0, %v1731
        %v1733 = vrot.slane %v1728, %v1732
        %v1735 = vadd.f32 %v1727, %v1733
        %1736 = vst.msk [vmem:[%s324] sm:$0xff] %vm815, %v1735
        %s1737 = sand.u32 %s186, 1
        %s1738 = scalar_lea.sflag [#allocation6], %s1737
        %s1739 = sand.u32 %s186, 1
        %s1740 = smul.addr %s1739, 8
        %s1741 = scalar_lea.vmem [#allocation9], %s1740
        // Predicated region
        $region57: #{tpu_custom_call.1} parent=43 // pred_check
          %p1742 = pneg %p196
        $region58: #{tpu_custom_call.1} parent=43 // pred_check_branch
          %1744 = sbr.rel (%p1742) target = $region60
        $region59: #{tpu_custom_call.1} parent=43 // pred_region
          %s1746 = ssub.s32 128, 128
          %1747 = vsyncadd %s1738, %s1746
          %s1748 = smul.addr %s30, 2
          %s1749 = sadd.s32 %s31, %s1748
          %s1750 = smul.addr %s1749, 128
          %s1751 = scalar_lea.hbm %s6, %s1750
          %s1753 = sshll.u32 %s1741, 4
          %s1754 = int_to_ptr.vmem [resolvable:$true] %s1753
          %1756 = dma.vmem_to_hbm [thread:$0]  %s1754, 128, %s1751, %s1738
        $region60: #{tpu_custom_call.1} parent=43 // pred_fallthru
          _
      $region44: #{tpu_custom_call.1} parent=5 // pred_fallthru
        _
      %p1757 = scmp.le.s32.totalorder 2, %s21
      // Predicated region
      $region61: #{tpu_custom_call.1} parent=5 // pred_check
        %p1758 = pneg %p1757
      $region62: #{tpu_custom_call.1} parent=5 // pred_check_branch
        %1760 = sbr.rel (%p1758) target = $region64
      $region63: #{tpu_custom_call.1} parent=5 // pred_region
        %s1761 = ssub.s32 %s21, 2
        // Predicated region
        $region65: #{tpu_custom_call.1} parent=63 // pred_check
          %p1762 = pneg %p202
        $region66: #{tpu_custom_call.1} parent=63 // pred_check_branch
          %1764 = sbr.rel (%p1762) target = $region68
        $region67: #{tpu_custom_call.1} parent=63 // pred_region
          %s1765 = sand.u32 %s187, 1
          %s1766 = scalar_lea.sflag [#allocation6], %s1765
          %s1767 = sand.u32 %s187, 1
          %s1768 = smul.addr %s1767, 8
          %s1769 = scalar_lea.vmem [#allocation9], %s1768
          %1770 = dma.done %s1766, 128
        $region68: #{tpu_custom_call.1} parent=63 // pred_fallthru
          _
      $region64: #{tpu_custom_call.1} parent=5 // pred_fallthru
        _
    $region6: #{tpu_custom_call.1} parent=1 // loop_footer
      %s25 = sadd.s32 1, %s21
    $region7: #{tpu_custom_call.1} parent=1 // loop_footer_branch
      %20 = sbr.rel target = $region3
    $region8: #{tpu_custom_call.1} parent=1 // loop_exit
      _
    %1771 = vsyncpa [#allocation5], 1
    %s1772 = scalar_lea.sflag [#allocation5], 1
    %1773 = vsyncpa %s1772, 1
    %1774 = vsyncpa [#allocation8], 1
    %s1775 = scalar_lea.sflag [#allocation8], 1
    %1776 = vsyncpa %s1775, 1
    %1777 = vsyncpa [#allocation6], 1
    %s1778 = scalar_lea.sflag [#allocation6], 1
    %1779 = vsyncpa %s1778, 1

</llo_original>
